<compile_context>
chip_gen: v6e
topology: v6e:2x2x1
jax: 0.10.0
libtpu: 0.0.40
codegen_flags: <defaults>
</compile_context>

<pallas_src>
import functools

import jax
import jax.numpy as jnp
from jax.experimental import pallas as pl
from jax.experimental.pallas import tpu as pltpu


# ----------------------------------------------------------------------------
# Pallas kernel: one EncoderLayer forward for a single batch element.
# ----------------------------------------------------------------------------
def encoder_layer_kernel(
    x_ref,      # (L, C)   query-side features (batch dim squeezed)
    src_ref,    # (S, C)   key/value-side features
    wq_ref,     # (C, C)   q_proj weight, transposed: y = x @ W
    wkv_ref,    # (C, 2C)  [k_proj | v_proj] packed, transposed
    wm_ref,     # (C, C)   merge weight (transposed)
    w1x_ref,    # (C, 2C)  mlp[0] weight rows acting on x        (transposed)
    w1m_ref,    # (C, 2C)  mlp[0] weight rows acting on message  (transposed)
    w2_ref,     # (2C, C)  mlp[2] weight (transposed)
    ln_ref,     # (4, C)   [norm1 gamma; norm1 beta; norm2 gamma; norm2 beta]
    hmask_ref,  # (C, C)   block-diagonal head mask (compute dtype)
    out_ref,    # (L, C)
    *,
    eps_attn: float = 1e-6,
    eps_ln: float = 1e-5,
    approx_recip: bool = True,
):
    f32 = jnp.float32
    cdt = wq_ref.dtype                     # MXU operand dtype (bf16 default)
    C = wq_ref.shape[0]

    x_in = x_ref[...]                      # (L, C) native dtype
    src_in = src_ref[...]                  # (S, C)
    x = x_in.astype(f32)                   # f32 copy for residual

    xc = x_in.astype(cdt)                  # MXU operands
    sc = src_in.astype(cdt)

    # --- fused q / (k|v) projections (bias-free Linear) -> MXU matmuls ------
    q = jnp.dot(xc, wq_ref[...], preferred_element_type=f32)      # (L, C)
    kv = jnp.dot(sc, wkv_ref[...], preferred_element_type=f32)    # (S, 2C)
    k = kv[:, :C]
    v = kv[:, C:]

    # --- LoFTR LinearAttention feature map: elu(x) + 1 (f32, VPU/EUP) -------
    Q = jnp.where(q > 0, q + 1.0, jnp.exp(q))
    K = jnp.where(k > 0, k + 1.0, jnp.exp(k))

    hmask = hmask_ref[...]                                         # (C, C)

    # KV[c', c] = sum_s K[s, c'] * V[s, c]; contraction over the row dim of
    # both operands (transposed-LHS MXU form, no explicit XLU transpose),
    # then masked to per-head blocks.
    KV = jax.lax.dot_general(
        K.astype(cdt), v.astype(cdt),
        dimension_numbers=(((0,), (0,)), ((), ())),
        preferred_element_type=f32)                                # (C, C)
    KV = KV * hmask.astype(f32)

    Ksum = jnp.sum(K, axis=0, keepdims=True)                       # (1, C)
    numer = jnp.dot(Q.astype(cdt), KV.astype(cdt),
                    preferred_element_type=f32)                    # (L, C)
    # zden[l, c] = sum_{c' in head(c)} Q[l, c'] * Ksum[c']
    zden = jnp.dot((Q * Ksum).astype(cdt), hmask,
                   preferred_element_type=f32)                     # (L, C)
    denom = zden + eps_attn
    if approx_recip:
        # TODO(synk): ~1e-3 relative deviation vs exact division; gate off if
        # bit-comparable output to the torch reference is required.
        message = numer * pl.reciprocal(denom, approx=True)
    else:
        message = numer / denom

    # --- merge + LayerNorm1 --------------------------------------------------
    g1 = ln_ref[0:1, :]
    b1 = ln_ref[1:2, :]
    g2 = ln_ref[2:3, :]
    b2 = ln_ref[3:4, :]

    message = jnp.dot(message.astype(cdt), wm_ref[...],
                      preferred_element_type=f32)
    mu = jnp.mean(message, axis=-1, keepdims=True)
    var = jnp.mean((message - mu) ** 2, axis=-1, keepdims=True)
    message = (message - mu) * jax.lax.rsqrt(var + eps_ln)
    message = message * g1 + b1

    # --- MLP on concat([x, message]) without the lane-dim concat ------------
    hid = (jnp.dot(xc, w1x_ref[...], preferred_element_type=f32) +
           jnp.dot(message.astype(cdt), w1m_ref[...],
                   preferred_element_type=f32))
    hid = jnp.maximum(hid, 0.0)
    message = jnp.dot(hid.astype(cdt), w2_ref[...],
                      preferred_element_type=f32)
    mu = jnp.mean(message, axis=-1, keepdims=True)
    var = jnp.mean((message - mu) ** 2, axis=-1, keepdims=True)
    message = (message - mu) * jax.lax.rsqrt(var + eps_ln)
    message = message * g2 + b2

    # --- residual ------------------------------------------------------------
    out_ref[...] = (x + message).astype(out_ref.dtype)


# ----------------------------------------------------------------------------
# Wrapper: one EncoderLayer over the full batch (grid over N).
# ----------------------------------------------------------------------------
def encoder_layer(x, source, params, nhead, *, compute_dtype=jnp.bfloat16):
    N, L, C = x.shape
    S = source.shape[1]
    wq, wk, wv, wm, w1, w2, g1, b1, g2, b2 = params
    cdt = compute_dtype

    # Pack / split / cast weights once (plain XLA ops outside the kernel).
    wq_c = wq.astype(cdt)                                  # (C, C)
    wkv_c = jnp.concatenate([wk, wv], axis=1).astype(cdt)  # (C, 2C)
    wm_c = wm.astype(cdt)                                  # (C, C)
    w1x_c = w1[:C, :].astype(cdt)                          # (C, 2C) acts on x
    w1m_c = w1[C:, :].astype(cdt)                          # (C, 2C) acts on msg
    w2_c = w2.astype(cdt)                                  # (2C, C)
    ln = jnp.concatenate([g1, b1, g2, b2], axis=0).astype(jnp.float32)  # (4, C)

    # Block-diagonal head mask: head h owns channels [h*D, (h+1)*D).
    d = C // nhead
    head_id = jnp.arange(C, dtype=jnp.int32) // d
    hmask = (head_id[:, None] == head_id[None, :]).astype(cdt)   # (C, C)

    # --- VMEM budget: single-buffered weights + double-buffered I/O tiles +
    # an upper bound on the f32 intermediate live set; cap at the v7x-safe
    # 64 MiB physical limit.
    w_itm = jnp.dtype(cdt).itemsize
    io_itm = jnp.dtype(x.dtype).itemsize
    weight_bytes = (wq_c.size + wkv_c.size + wm_c.size + w1x_c.size +
                    w1m_c.size + w2_c.size + hmask.size) * w_itm + ln.size * 4
    io_bytes = 2 * (2 * L * C + S * C) * io_itm          # x, out, src x2 bufs
    act_bytes = 4 * (8 * L * C + 5 * S * C + 2 * C * C)  # f32 temporaries
    vmem_limit = int(min(64 << 20,
                         max(16 << 20, 2 * (weight_bytes + io_bytes + act_bytes))))

    def const_spec(shape):
        # Whole-array, grid-invariant block; single-buffered (resident once).
        n = len(shape)
        return pl.BlockSpec(shape, lambda i, n=n: (0,) * n,
                            pipeline_mode=pl.Buffered(1))

    # One batch element per grid step; batch axis is "parallel" so both v7x
    # TensorCores get work whenever N >= 2.
    # TODO(synk): if N == 1 at production sizes, add a second parallel grid
    # axis over query-row tiles of L (duplicating the K/V projection + KV).
    grid = (N,)

    out = pl.pallas_call(
        encoder_layer_kernel,
        out_shape=jax.ShapeDtypeStruct((N, L, C), x.dtype),
        grid=grid,
        in_specs=[
            pl.BlockSpec((None, L, C), lambda i: (i, 0, 0)),   # x
            pl.BlockSpec((None, S, C), lambda i: (i, 0, 0)),   # source
            const_spec((C, C)),          # wq
            const_spec((C, 2 * C)),      # wkv
            const_spec((C, C)),          # wm
            const_spec((C, 2 * C)),      # w1x
            const_spec((C, 2 * C)),      # w1m
            const_spec((2 * C, C)),      # w2
            const_spec((4, C)),          # ln params
            const_spec((C, C)),          # head mask
        ],
        out_specs=pl.BlockSpec((None, L, C), lambda i: (i, 0, 0)),
        compiler_params=pltpu.CompilerParams(
            dimension_semantics=("parallel",),
            vmem_limit_bytes=vmem_limit),
    )(x, source, wq_c, wkv_c, wm_c, w1x_c, w1m_c, w2_c, ln, hmask)
    return out


# ----------------------------------------------------------------------------
# Parameter init (xavier_uniform for dim>1 params, ones/zeros for LayerNorm),
# mirroring FeatureTransformer._reset_parameters.
# ----------------------------------------------------------------------------
def xavier_uniform(key, out_features, in_features, dtype=jnp.float32):
    bound = (6.0 / (in_features + out_features)) ** 0.5
    # PyTorch weight shape is (out, in); we store the transposed (in, out).
    w = jax.random.uniform(key, (out_features, in_features), dtype,
                           minval=-bound, maxval=bound)
    return w.T


def init_encoder_layer_params(key, d_model):
    C = d_model
    ks = jax.random.split(key, 6)
    wq = xavier_uniform(ks[0], C, C)
    wk = xavier_uniform(ks[1], C, C)
    wv = xavier_uniform(ks[2], C, C)
    wm = xavier_uniform(ks[3], C, C)
    w1 = xavier_uniform(ks[4], 2 * C, 2 * C)
    w2 = xavier_uniform(ks[5], C, 2 * C)
    g1 = jnp.ones((1, C), jnp.float32)
    b1 = jnp.zeros((1, C), jnp.float32)
    g2 = jnp.ones((1, C), jnp.float32)
    b2 = jnp.zeros((1, C), jnp.float32)
    return (wq, wk, wv, wm, w1, w2, g1, b1, g2, b2)


# ----------------------------------------------------------------------------
# FeatureTransformer.forward (cls_token=False, masks=None).
# ----------------------------------------------------------------------------
def feature_transformer(feat0, feat1, layers_params, layer_names, nhead,
                        compute_dtype=jnp.bfloat16):
    # TODO(synk): mask0/mask1 and cls_token=True paths are not implemented.
    for params, name in zip(layers_params, layer_names):
        if name == "self":
            # Two independent calls sharing weights; each call's (N,) grid is
            # already parallel across TensorCores, so no stack/split HBM
            # round-trip is needed.
            feat0 = encoder_layer(feat0, feat0, params, nhead,
                                  compute_dtype=compute_dtype)
            feat1 = encoder_layer(feat1, feat1, params, nhead,
                                  compute_dtype=compute_dtype)
        elif name == "cross":
            # PyTorch updates feat0 first and feeds the UPDATED feat0 into the
            # second call — preserve that ordering.
            feat0 = encoder_layer(feat0, feat1, params, nhead,
                                  compute_dtype=compute_dtype)
            feat1 = encoder_layer(feat1, feat0, params, nhead,
                                  compute_dtype=compute_dtype)
        else:
            raise KeyError(name)
    return feat0, feat1


if __name__ == "__main__":
    config = {
        "d_model": 32,
        "nhead": 4,
        "layer_names": ["self", "cross"],
        "attention": "linear",
    }
    N, L, S, C = 2, 8, 8, config["d_model"]

    key = jax.random.PRNGKey(0)
    k_f0, k_f1, k_layers = jax.random.split(key, 3)
    feat0 = jax.random.normal(k_f0, (N, L, C), jnp.float32)
    feat1 = jax.random.normal(k_f1, (N, S, C), jnp.float32)

    layer_keys = jax.random.split(k_layers, len(config["layer_names"]))
    layers_params = [init_encoder_layer_params(k, C) for k in layer_keys]

    run = jax.jit(functools.partial(
        feature_transformer,
        layer_names=tuple(config["layer_names"]),
        nhead=config["nhead"]))
    out0, out1 = run(feat0, feat1, layers_params)
    jax.block_until_ready((out0, out1))

    assert out0.shape == (N, L, C) and out1.shape == (N, S, C)
    assert jnp.all(jnp.isfinite(out0)) and jnp.all(jnp.isfinite(out1))
    print("KERNEL_OK")
</pallas_src>

<mosaic_0001>
module attributes {stable_mosaic.version = 11 : i64} {
  func.func @encoder_layer_kernel(%arg0: i32, %arg1: memref<1x8x32xf32, #tpu.memory_space<vmem>>, %arg2: memref<1x8x32xf32, #tpu.memory_space<vmem>>, %arg3: memref<32x32xbf16, #tpu.memory_space<vmem>>, %arg4: memref<32x64xbf16, #tpu.memory_space<vmem>>, %arg5: memref<32x32xbf16, #tpu.memory_space<vmem>>, %arg6: memref<32x64xbf16, #tpu.memory_space<vmem>>, %arg7: memref<32x64xbf16, #tpu.memory_space<vmem>>, %arg8: memref<64x32xbf16, #tpu.memory_space<vmem>>, %arg9: memref<4x32xf32, #tpu.memory_space<vmem>>, %arg10: memref<32x32xbf16, #tpu.memory_space<vmem>>, %arg11: memref<1x8x32xf32, #tpu.memory_space<vmem>>) attributes {dimension_semantics = [#tpu.dimension_semantics<parallel>], iteration_bounds = array<i64: 2>, scalar_prefetch = 0 : i64, scratch_operands = 0 : i64, tpu.core_type = #tpu.core_type<tc>, window_params = [{transform_indices = @transform_0, window_bounds = array<i64: 1, 8, 32>}, {transform_indices = @transform_1, window_bounds = array<i64: 1, 8, 32>}, {pipeline_mode = #tpu.pipeline_mode<synchronous>, transform_indices = @transform_2, window_bounds = array<i64: 32, 32>}, {pipeline_mode = #tpu.pipeline_mode<synchronous>, transform_indices = @transform_3, window_bounds = array<i64: 32, 64>}, {pipeline_mode = #tpu.pipeline_mode<synchronous>, transform_indices = @transform_4, window_bounds = array<i64: 32, 32>}, {pipeline_mode = #tpu.pipeline_mode<synchronous>, transform_indices = @transform_5, window_bounds = array<i64: 32, 64>}, {pipeline_mode = #tpu.pipeline_mode<synchronous>, transform_indices = @transform_6, window_bounds = array<i64: 32, 64>}, {pipeline_mode = #tpu.pipeline_mode<synchronous>, transform_indices = @transform_7, window_bounds = array<i64: 64, 32>}, {pipeline_mode = #tpu.pipeline_mode<synchronous>, transform_indices = @transform_8, window_bounds = array<i64: 4, 32>}, {pipeline_mode = #tpu.pipeline_mode<synchronous>, transform_indices = @transform_9, window_bounds = array<i64: 32, 32>}, {transform_indices = @transform_10, window_bounds = array<i64: 1, 8, 32>}]} {
    %c0 = arith.constant 0 : index
    %c0_0 = arith.constant 0 : index
    %c0_1 = arith.constant 0 : index
    %0 = vector.load %arg1[%c0, %c0_0, %c0_1] : memref<1x8x32xf32, #tpu.memory_space<vmem>>, vector<1x8x32xf32>
    %1 = vector.shape_cast %0 : vector<1x8x32xf32> to vector<8x32xf32>
    %c0_2 = arith.constant 0 : index
    %c0_3 = arith.constant 0 : index
    %c0_4 = arith.constant 0 : index
    %2 = vector.load %arg2[%c0_2, %c0_3, %c0_4] : memref<1x8x32xf32, #tpu.memory_space<vmem>>, vector<1x8x32xf32>
    %3 = vector.shape_cast %2 : vector<1x8x32xf32> to vector<8x32xf32>
    %4 = arith.truncf %1 : vector<8x32xf32> to vector<8x32xbf16>
    %5 = arith.truncf %3 : vector<8x32xf32> to vector<8x32xbf16>
    %c0_5 = arith.constant 0 : index
    %c0_6 = arith.constant 0 : index
    %6 = vector.load %arg3[%c0_5, %c0_6] : memref<32x32xbf16, #tpu.memory_space<vmem>>, vector<32x32xbf16>
    %cst = arith.constant dense<0.000000e+00> : vector<8x32xf32>
    %7 = tpu.matmul %4, %6, %cst {dimension_numbers = #tpu.dot_dimension_numbers<[1], [0], [0], [1], [0, 0, 1, 1], [], []>} : vector<8x32xbf16>, vector<32x32xbf16>, vector<8x32xf32> -> vector<8x32xf32>
    %c0_7 = arith.constant 0 : index
    %c0_8 = arith.constant 0 : index
    %8 = vector.load %arg4[%c0_7, %c0_8] : memref<32x64xbf16, #tpu.memory_space<vmem>>, vector<32x64xbf16>
    %cst_9 = arith.constant dense<0.000000e+00> : vector<8x64xf32>
    %9 = tpu.matmul %5, %8, %cst_9 {dimension_numbers = #tpu.dot_dimension_numbers<[1], [0], [0], [1], [0, 0, 1, 1], [], []>} : vector<8x32xbf16>, vector<32x64xbf16>, vector<8x64xf32> -> vector<8x64xf32>
    %10 = vector.extract_strided_slice %9 {offsets = [0, 0], sizes = [8, 32], strides = [1, 1]} : vector<8x64xf32> to vector<8x32xf32>
    %11 = vector.extract_strided_slice %9 {offsets = [0, 32], sizes = [8, 32], strides = [1, 1]} : vector<8x64xf32> to vector<8x32xf32>
    %cst_10 = arith.constant 0.000000e+00 : f32
    %12 = vector.broadcast %cst_10 : f32 to vector<8x32xf32>
    %13 = arith.cmpf ogt, %7, %12 : vector<8x32xf32>
    %cst_11 = arith.constant 1.000000e+00 : f32
    %14 = vector.broadcast %cst_11 : f32 to vector<8x32xf32>
    %15 = arith.addf %7, %14 : vector<8x32xf32>
    %16 = math.exp %7 : vector<8x32xf32>
    %17 = arith.select %13, %15, %16 : vector<8x32xi1>, vector<8x32xf32>
    %cst_12 = arith.constant 0.000000e+00 : f32
    %18 = vector.broadcast %cst_12 : f32 to vector<8x32xf32>
    %19 = arith.cmpf ogt, %10, %18 : vector<8x32xf32>
    %cst_13 = arith.constant 1.000000e+00 : f32
    %20 = vector.broadcast %cst_13 : f32 to vector<8x32xf32>
    %21 = arith.addf %10, %20 : vector<8x32xf32>
    %22 = math.exp %10 : vector<8x32xf32>
    %23 = arith.select %19, %21, %22 : vector<8x32xi1>, vector<8x32xf32>
    %c0_14 = arith.constant 0 : index
    %c0_15 = arith.constant 0 : index
    %24 = vector.load %arg10[%c0_14, %c0_15] : memref<32x32xbf16, #tpu.memory_space<vmem>>, vector<32x32xbf16>
    %25 = arith.truncf %23 : vector<8x32xf32> to vector<8x32xbf16>
    %26 = arith.truncf %11 : vector<8x32xf32> to vector<8x32xbf16>
    %cst_16 = arith.constant dense<0.000000e+00> : vector<32x32xf32>
    %27 = tpu.matmul %25, %26, %cst_16 {dimension_numbers = #tpu.dot_dimension_numbers<[0], [0], [1], [1], [0, 1, 1, 1], [], []>} : vector<8x32xbf16>, vector<8x32xbf16>, vector<32x32xf32> -> vector<32x32xf32>
    %28 = arith.extf %24 : vector<32x32xbf16> to vector<32x32xf32>
    %29 = arith.mulf %27, %28 : vector<32x32xf32>
    %cst_17 = arith.constant dense<0.000000e+00> : vector<32xf32>
    %30 = vector.multi_reduction <add>, %23, %cst_17 [0] : vector<8x32xf32> to vector<32xf32>
    %31 = vector.shape_cast %30 : vector<32xf32> to vector<1x32xf32>
    %32 = arith.truncf %17 : vector<8x32xf32> to vector<8x32xbf16>
    %33 = arith.truncf %29 : vector<32x32xf32> to vector<32x32xbf16>
    %cst_18 = arith.constant dense<0.000000e+00> : vector<8x32xf32>
    %34 = tpu.matmul %32, %33, %cst_18 {dimension_numbers = #tpu.dot_dimension_numbers<[1], [0], [0], [1], [0, 0, 1, 1], [], []>} : vector<8x32xbf16>, vector<32x32xbf16>, vector<8x32xf32> -> vector<8x32xf32>
    %35 = vector.broadcast %31 : vector<1x32xf32> to vector<8x32xf32>
    %36 = arith.mulf %17, %35 : vector<8x32xf32>
    %37 = arith.truncf %36 : vector<8x32xf32> to vector<8x32xbf16>
    %cst_19 = arith.constant dense<0.000000e+00> : vector<8x32xf32>
    %38 = tpu.matmul %37, %24, %cst_19 {dimension_numbers = #tpu.dot_dimension_numbers<[1], [0], [0], [1], [0, 0, 1, 1], [], []>} : vector<8x32xbf16>, vector<32x32xbf16>, vector<8x32xf32> -> vector<8x32xf32>
    %cst_20 = arith.constant 9.99999997E-7 : f32
    %39 = vector.broadcast %cst_20 : f32 to vector<8x32xf32>
    %40 = arith.addf %38, %39 : vector<8x32xf32>
    %41 = tpu.reciprocal %40 {approx = true} : vector<8x32xf32> -> vector<8x32xf32>
    %42 = arith.mulf %34, %41 : vector<8x32xf32>
    %c0_21 = arith.constant 0 : index
    %c0_22 = arith.constant 0 : index
    %43 = vector.load %arg9[%c0_21, %c0_22] : memref<4x32xf32, #tpu.memory_space<vmem>>, vector<1x32xf32>
    %c1 = arith.constant 1 : index
    %c0_23 = arith.constant 0 : index
    %44 = vector.load %arg9[%c1, %c0_23] : memref<4x32xf32, #tpu.memory_space<vmem>>, vector<1x32xf32>
    %c2 = arith.constant 2 : index
    %c0_24 = arith.constant 0 : index
    %45 = vector.load %arg9[%c2, %c0_24] : memref<4x32xf32, #tpu.memory_space<vmem>>, vector<1x32xf32>
    %c3 = arith.constant 3 : index
    %c0_25 = arith.constant 0 : index
    %46 = vector.load %arg9[%c3, %c0_25] : memref<4x32xf32, #tpu.memory_space<vmem>>, vector<1x32xf32>
    %47 = arith.truncf %42 : vector<8x32xf32> to vector<8x32xbf16>
    %c0_26 = arith.constant 0 : index
    %c0_27 = arith.constant 0 : index
    %48 = vector.load %arg5[%c0_26, %c0_27] : memref<32x32xbf16, #tpu.memory_space<vmem>>, vector<32x32xbf16>
    %cst_28 = arith.constant dense<0.000000e+00> : vector<8x32xf32>
    %49 = tpu.matmul %47, %48, %cst_28 {dimension_numbers = #tpu.dot_dimension_numbers<[1], [0], [0], [1], [0, 0, 1, 1], [], []>} : vector<8x32xbf16>, vector<32x32xbf16>, vector<8x32xf32> -> vector<8x32xf32>
    %cst_29 = arith.constant dense<0.000000e+00> : vector<8xf32>
    %50 = vector.multi_reduction <add>, %49, %cst_29 [1] : vector<8x32xf32> to vector<8xf32>
    %51 = vector.shape_cast %50 : vector<8xf32> to vector<8x1xf32>
    %cst_30 = arith.constant 3.200000e+01 : f32
    %52 = vector.broadcast %cst_30 : f32 to vector<8x1xf32>
    %53 = arith.divf %51, %52 : vector<8x1xf32>
    %54 = vector.broadcast %53 : vector<8x1xf32> to vector<8x32xf32>
    %55 = arith.subf %49, %54 : vector<8x32xf32>
    %56 = arith.mulf %55, %55 : vector<8x32xf32>
    %cst_31 = arith.constant dense<0.000000e+00> : vector<8xf32>
    %57 = vector.multi_reduction <add>, %56, %cst_31 [1] : vector<8x32xf32> to vector<8xf32>
    %58 = vector.shape_cast %57 : vector<8xf32> to vector<8x1xf32>
    %cst_32 = arith.constant 3.200000e+01 : f32
    %59 = vector.broadcast %cst_32 : f32 to vector<8x1xf32>
    %60 = arith.divf %58, %59 : vector<8x1xf32>
    %61 = vector.broadcast %53 : vector<8x1xf32> to vector<8x32xf32>
    %62 = arith.subf %49, %61 : vector<8x32xf32>
    %cst_33 = arith.constant 9.99999974E-6 : f32
    %63 = vector.broadcast %cst_33 : f32 to vector<8x1xf32>
    %64 = arith.addf %60, %63 : vector<8x1xf32>
    %65 = math.rsqrt %64 : vector<8x1xf32>
    %66 = vector.broadcast %65 : vector<8x1xf32> to vector<8x32xf32>
    %67 = arith.mulf %62, %66 : vector<8x32xf32>
    %68 = vector.broadcast %43 : vector<1x32xf32> to vector<8x32xf32>
    %69 = arith.mulf %67, %68 : vector<8x32xf32>
    %70 = vector.broadcast %44 : vector<1x32xf32> to vector<8x32xf32>
    %71 = arith.addf %69, %70 : vector<8x32xf32>
    %c0_34 = arith.constant 0 : index
    %c0_35 = arith.constant 0 : index
    %72 = vector.load %arg6[%c0_34, %c0_35] : memref<32x64xbf16, #tpu.memory_space<vmem>>, vector<32x64xbf16>
    %cst_36 = arith.constant dense<0.000000e+00> : vector<8x64xf32>
    %73 = tpu.matmul %4, %72, %cst_36 {dimension_numbers = #tpu.dot_dimension_numbers<[1], [0], [0], [1], [0, 0, 1, 1], [], []>} : vector<8x32xbf16>, vector<32x64xbf16>, vector<8x64xf32> -> vector<8x64xf32>
    %74 = arith.truncf %71 : vector<8x32xf32> to vector<8x32xbf16>
    %c0_37 = arith.constant 0 : index
    %c0_38 = arith.constant 0 : index
    %75 = vector.load %arg7[%c0_37, %c0_38] : memref<32x64xbf16, #tpu.memory_space<vmem>>, vector<32x64xbf16>
    %cst_39 = arith.constant dense<0.000000e+00> : vector<8x64xf32>
    %76 = tpu.matmul %74, %75, %cst_39 {dimension_numbers = #tpu.dot_dimension_numbers<[1], [0], [0], [1], [0, 0, 1, 1], [], []>} : vector<8x32xbf16>, vector<32x64xbf16>, vector<8x64xf32> -> vector<8x64xf32>
    %77 = arith.addf %73, %76 : vector<8x64xf32>
    %cst_40 = arith.constant 0.000000e+00 : f32
    %78 = vector.broadcast %cst_40 : f32 to vector<8x64xf32>
    %79 = arith.maximumf %77, %78 : vector<8x64xf32>
    %80 = arith.truncf %79 : vector<8x64xf32> to vector<8x64xbf16>
    %c0_41 = arith.constant 0 : index
    %c0_42 = arith.constant 0 : index
    %81 = vector.load %arg8[%c0_41, %c0_42] : memref<64x32xbf16, #tpu.memory_space<vmem>>, vector<64x32xbf16>
    %cst_43 = arith.constant dense<0.000000e+00> : vector<8x32xf32>
    %82 = tpu.matmul %80, %81, %cst_43 {dimension_numbers = #tpu.dot_dimension_numbers<[1], [0], [0], [1], [0, 0, 1, 1], [], []>} : vector<8x64xbf16>, vector<64x32xbf16>, vector<8x32xf32> -> vector<8x32xf32>
    %cst_44 = arith.constant dense<0.000000e+00> : vector<8xf32>
    %83 = vector.multi_reduction <add>, %82, %cst_44 [1] : vector<8x32xf32> to vector<8xf32>
    %84 = vector.shape_cast %83 : vector<8xf32> to vector<8x1xf32>
    %cst_45 = arith.constant 3.200000e+01 : f32
    %85 = vector.broadcast %cst_45 : f32 to vector<8x1xf32>
    %86 = arith.divf %84, %85 : vector<8x1xf32>
    %87 = vector.broadcast %86 : vector<8x1xf32> to vector<8x32xf32>
    %88 = arith.subf %82, %87 : vector<8x32xf32>
    %89 = arith.mulf %88, %88 : vector<8x32xf32>
    %cst_46 = arith.constant dense<0.000000e+00> : vector<8xf32>
    %90 = vector.multi_reduction <add>, %89, %cst_46 [1] : vector<8x32xf32> to vector<8xf32>
    %91 = vector.shape_cast %90 : vector<8xf32> to vector<8x1xf32>
    %cst_47 = arith.constant 3.200000e+01 : f32
    %92 = vector.broadcast %cst_47 : f32 to vector<8x1xf32>
    %93 = arith.divf %91, %92 : vector<8x1xf32>
    %94 = vector.broadcast %86 : vector<8x1xf32> to vector<8x32xf32>
    %95 = arith.subf %82, %94 : vector<8x32xf32>
    %cst_48 = arith.constant 9.99999974E-6 : f32
    %96 = vector.broadcast %cst_48 : f32 to vector<8x1xf32>
    %97 = arith.addf %93, %96 : vector<8x1xf32>
    %98 = math.rsqrt %97 : vector<8x1xf32>
    %99 = vector.broadcast %98 : vector<8x1xf32> to vector<8x32xf32>
    %100 = arith.mulf %95, %99 : vector<8x32xf32>
    %101 = vector.broadcast %45 : vector<1x32xf32> to vector<8x32xf32>
    %102 = arith.mulf %100, %101 : vector<8x32xf32>
    %103 = vector.broadcast %46 : vector<1x32xf32> to vector<8x32xf32>
    %104 = arith.addf %102, %103 : vector<8x32xf32>
    %105 = arith.addf %1, %104 : vector<8x32xf32>
    %c0_49 = arith.constant 0 : index
    %c0_50 = arith.constant 0 : index
    %c0_51 = arith.constant 0 : index
    %106 = vector.load %arg11[%c0_49, %c0_50, %c0_51] : memref<1x8x32xf32, #tpu.memory_space<vmem>>, vector<1x8x32xf32>
    %107 = vector.shape_cast %106 : vector<1x8x32xf32> to vector<8x32xf32>
    %108 = vector.shape_cast %105 : vector<8x32xf32> to vector<1x8x32xf32>
    tpu.vector_store %arg11[%c0_49, %c0_50, %c0_51], %108 {strides = array<i32>} : memref<1x8x32xf32, #tpu.memory_space<vmem>>, vector<1x8x32xf32>,
    return
  }
  func.func @transform_0(%arg0: i32) -> (i32, i32, i32) {
    %c0_i32 = arith.constant 0 : i32
    %c0_i32_0 = arith.constant 0 : i32
    %c0_i32_1 = arith.constant 0 : i32
    return %arg0, %c0_i32, %c0_i32_0 : i32, i32, i32
  }
  func.func @transform_1(%arg0: i32) -> (i32, i32, i32) {
    %c0_i32 = arith.constant 0 : i32
    %c0_i32_0 = arith.constant 0 : i32
    %c0_i32_1 = arith.constant 0 : i32
    return %arg0, %c0_i32, %c0_i32_0 : i32, i32, i32
  }
  func.func @transform_2(%arg0: i32) -> (i32, i32) {
    %c0_i32 = arith.constant 0 : i32
    %c0_i32_0 = arith.constant 0 : i32
    %c0_i32_1 = arith.constant 0 : i32
    return %c0_i32, %c0_i32_0 : i32, i32
  }
  func.func @transform_3(%arg0: i32) -> (i32, i32) {
    %c0_i32 = arith.constant 0 : i32
    %c0_i32_0 = arith.constant 0 : i32
    %c0_i32_1 = arith.constant 0 : i32
    return %c0_i32, %c0_i32_0 : i32, i32
  }
  func.func @transform_4(%arg0: i32) -> (i32, i32) {
    %c0_i32 = arith.constant 0 : i32
    %c0_i32_0 = arith.constant 0 : i32
    %c0_i32_1 = arith.constant 0 : i32
    return %c0_i32, %c0_i32_0 : i32, i32
  }
  func.func @transform_5(%arg0: i32) -> (i32, i32) {
    %c0_i32 = arith.constant 0 : i32
    %c0_i32_0 = arith.constant 0 : i32
    %c0_i32_1 = arith.constant 0 : i32
    return %c0_i32, %c0_i32_0 : i32, i32
  }
  func.func @transform_6(%arg0: i32) -> (i32, i32) {
    %c0_i32 = arith.constant 0 : i32
    %c0_i32_0 = arith.constant 0 : i32
    %c0_i32_1 = arith.constant 0 : i32
    return %c0_i32, %c0_i32_0 : i32, i32
  }
  func.func @transform_7(%arg0: i32) -> (i32, i32) {
    %c0_i32 = arith.constant 0 : i32
    %c0_i32_0 = arith.constant 0 : i32
    %c0_i32_1 = arith.constant 0 : i32
    return %c0_i32, %c0_i32_0 : i32, i32
  }
  func.func @transform_8(%arg0: i32) -> (i32, i32) {
    %c0_i32 = arith.constant 0 : i32
    %c0_i32_0 = arith.constant 0 : i32
    %c0_i32_1 = arith.constant 0 : i32
    return %c0_i32, %c0_i32_0 : i32, i32
  }
  func.func @transform_9(%arg0: i32) -> (i32, i32) {
    %c0_i32 = arith.constant 0 : i32
    %c0_i32_0 = arith.constant 0 : i32
    %c0_i32_1 = arith.constant 0 : i32
    return %c0_i32, %c0_i32_0 : i32, i32
  }
  func.func @transform_10(%arg0: i32) -> (i32, i32, i32) {
    %c0_i32 = arith.constant 0 : i32
    %c0_i32_0 = arith.constant 0 : i32
    %c0_i32_1 = arith.constant 0 : i32
    return %arg0, %c0_i32, %c0_i32_0 : i32, i32, i32
  }
}

module attributes {stable_mosaic.version = 11 : i64} {
  func.func @encoder_layer_kernel(%arg0: i32, %arg1: memref<1x8x32xf32, #tpu.memory_space<vmem>>, %arg2: memref<1x8x32xf32, #tpu.memory_space<vmem>>, %arg3: memref<32x32xbf16, #tpu.memory_space<vmem>>, %arg4: memref<32x64xbf16, #tpu.memory_space<vmem>>, %arg5: memref<32x32xbf16, #tpu.memory_space<vmem>>, %arg6: memref<32x64xbf16, #tpu.memory_space<vmem>>, %arg7: memref<32x64xbf16, #tpu.memory_space<vmem>>, %arg8: memref<64x32xbf16, #tpu.memory_space<vmem>>, %arg9: memref<4x32xf32, #tpu.memory_space<vmem>>, %arg10: memref<32x32xbf16, #tpu.memory_space<vmem>>, %arg11: memref<1x8x32xf32, #tpu.memory_space<vmem>>) attributes {dimension_semantics = [#tpu.dimension_semantics<parallel>], iteration_bounds = array<i64: 2>, scalar_prefetch = 0 : i64, scratch_operands = 0 : i64, tpu.core_type = #tpu.core_type<tc>, window_params = [{transform_indices = @transform_0, window_bounds = array<i64: 1, 8, 32>}, {transform_indices = @transform_1, window_bounds = array<i64: 1, 8, 32>}, {pipeline_mode = #tpu.pipeline_mode<synchronous>, transform_indices = @transform_2, window_bounds = array<i64: 32, 32>}, {pipeline_mode = #tpu.pipeline_mode<synchronous>, transform_indices = @transform_3, window_bounds = array<i64: 32, 64>}, {pipeline_mode = #tpu.pipeline_mode<synchronous>, transform_indices = @transform_4, window_bounds = array<i64: 32, 32>}, {pipeline_mode = #tpu.pipeline_mode<synchronous>, transform_indices = @transform_5, window_bounds = array<i64: 32, 64>}, {pipeline_mode = #tpu.pipeline_mode<synchronous>, transform_indices = @transform_6, window_bounds = array<i64: 32, 64>}, {pipeline_mode = #tpu.pipeline_mode<synchronous>, transform_indices = @transform_7, window_bounds = array<i64: 64, 32>}, {pipeline_mode = #tpu.pipeline_mode<synchronous>, transform_indices = @transform_8, window_bounds = array<i64: 4, 32>}, {pipeline_mode = #tpu.pipeline_mode<synchronous>, transform_indices = @transform_9, window_bounds = array<i64: 32, 32>}, {transform_indices = @transform_10, window_bounds = array<i64: 1, 8, 32>}]} {
    %c0 = arith.constant 0 : index
    %c0_0 = arith.constant 0 : index
    %c0_1 = arith.constant 0 : index
    %0 = vector.load %arg1[%c0, %c0_0, %c0_1] : memref<1x8x32xf32, #tpu.memory_space<vmem>>, vector<1x8x32xf32>
    %1 = vector.shape_cast %0 : vector<1x8x32xf32> to vector<8x32xf32>
    %c0_2 = arith.constant 0 : index
    %c0_3 = arith.constant 0 : index
    %c0_4 = arith.constant 0 : index
    %2 = vector.load %arg2[%c0_2, %c0_3, %c0_4] : memref<1x8x32xf32, #tpu.memory_space<vmem>>, vector<1x8x32xf32>
    %3 = vector.shape_cast %2 : vector<1x8x32xf32> to vector<8x32xf32>
    %4 = arith.truncf %1 : vector<8x32xf32> to vector<8x32xbf16>
    %5 = arith.truncf %3 : vector<8x32xf32> to vector<8x32xbf16>
    %c0_5 = arith.constant 0 : index
    %c0_6 = arith.constant 0 : index
    %6 = vector.load %arg3[%c0_5, %c0_6] : memref<32x32xbf16, #tpu.memory_space<vmem>>, vector<32x32xbf16>
    %cst = arith.constant dense<0.000000e+00> : vector<8x32xf32>
    %7 = tpu.matmul %4, %6, %cst {dimension_numbers = #tpu.dot_dimension_numbers<[1], [0], [0], [1], [0, 0, 1, 1], [], []>} : vector<8x32xbf16>, vector<32x32xbf16>, vector<8x32xf32> -> vector<8x32xf32>
    %c0_7 = arith.constant 0 : index
    %c0_8 = arith.constant 0 : index
    %8 = vector.load %arg4[%c0_7, %c0_8] : memref<32x64xbf16, #tpu.memory_space<vmem>>, vector<32x64xbf16>
    %cst_9 = arith.constant dense<0.000000e+00> : vector<8x64xf32>
    %9 = tpu.matmul %5, %8, %cst_9 {dimension_numbers = #tpu.dot_dimension_numbers<[1], [0], [0], [1], [0, 0, 1, 1], [], []>} : vector<8x32xbf16>, vector<32x64xbf16>, vector<8x64xf32> -> vector<8x64xf32>
    %10 = vector.extract_strided_slice %9 {offsets = [0, 0], sizes = [8, 32], strides = [1, 1]} : vector<8x64xf32> to vector<8x32xf32>
    %11 = vector.extract_strided_slice %9 {offsets = [0, 32], sizes = [8, 32], strides = [1, 1]} : vector<8x64xf32> to vector<8x32xf32>
    %cst_10 = arith.constant 0.000000e+00 : f32
    %12 = vector.broadcast %cst_10 : f32 to vector<8x32xf32>
    %13 = arith.cmpf ogt, %7, %12 : vector<8x32xf32>
    %cst_11 = arith.constant 1.000000e+00 : f32
    %14 = vector.broadcast %cst_11 : f32 to vector<8x32xf32>
    %15 = arith.addf %7, %14 : vector<8x32xf32>
    %16 = math.exp %7 : vector<8x32xf32>
    %17 = arith.select %13, %15, %16 : vector<8x32xi1>, vector<8x32xf32>
    %cst_12 = arith.constant 0.000000e+00 : f32
    %18 = vector.broadcast %cst_12 : f32 to vector<8x32xf32>
    %19 = arith.cmpf ogt, %10, %18 : vector<8x32xf32>
    %cst_13 = arith.constant 1.000000e+00 : f32
    %20 = vector.broadcast %cst_13 : f32 to vector<8x32xf32>
    %21 = arith.addf %10, %20 : vector<8x32xf32>
    %22 = math.exp %10 : vector<8x32xf32>
    %23 = arith.select %19, %21, %22 : vector<8x32xi1>, vector<8x32xf32>
    %c0_14 = arith.constant 0 : index
    %c0_15 = arith.constant 0 : index
    %24 = vector.load %arg10[%c0_14, %c0_15] : memref<32x32xbf16, #tpu.memory_space<vmem>>, vector<32x32xbf16>
    %25 = arith.truncf %23 : vector<8x32xf32> to vector<8x32xbf16>
    %26 = arith.truncf %11 : vector<8x32xf32> to vector<8x32xbf16>
    %cst_16 = arith.constant dense<0.000000e+00> : vector<32x32xf32>
    %27 = tpu.matmul %25, %26, %cst_16 {dimension_numbers = #tpu.dot_dimension_numbers<[0], [0], [1], [1], [0, 1, 1, 1], [], []>} : vector<8x32xbf16>, vector<8x32xbf16>, vector<32x32xf32> -> vector<32x32xf32>
    %28 = arith.extf %24 : vector<32x32xbf16> to vector<32x32xf32>
    %29 = arith.mulf %27, %28 : vector<32x32xf32>
    %cst_17 = arith.constant dense<0.000000e+00> : vector<32xf32>
    %30 = vector.multi_reduction <add>, %23, %cst_17 [0] : vector<8x32xf32> to vector<32xf32>
    %31 = vector.shape_cast %30 : vector<32xf32> to vector<1x32xf32>
    %32 = arith.truncf %17 : vector<8x32xf32> to vector<8x32xbf16>
    %33 = arith.truncf %29 : vector<32x32xf32> to vector<32x32xbf16>
    %cst_18 = arith.constant dense<0.000000e+00> : vector<8x32xf32>
    %34 = tpu.matmul %32, %33, %cst_18 {dimension_numbers = #tpu.dot_dimension_numbers<[1], [0], [0], [1], [0, 0, 1, 1], [], []>} : vector<8x32xbf16>, vector<32x32xbf16>, vector<8x32xf32> -> vector<8x32xf32>
    %35 = vector.broadcast %31 : vector<1x32xf32> to vector<8x32xf32>
    %36 = arith.mulf %17, %35 : vector<8x32xf32>
    %37 = arith.truncf %36 : vector<8x32xf32> to vector<8x32xbf16>
    %cst_19 = arith.constant dense<0.000000e+00> : vector<8x32xf32>
    %38 = tpu.matmul %37, %24, %cst_19 {dimension_numbers = #tpu.dot_dimension_numbers<[1], [0], [0], [1], [0, 0, 1, 1], [], []>} : vector<8x32xbf16>, vector<32x32xbf16>, vector<8x32xf32> -> vector<8x32xf32>
    %cst_20 = arith.constant 9.99999997E-7 : f32
    %39 = vector.broadcast %cst_20 : f32 to vector<8x32xf32>
    %40 = arith.addf %38, %39 : vector<8x32xf32>
    %41 = tpu.reciprocal %40 {approx = true} : vector<8x32xf32> -> vector<8x32xf32>
    %42 = arith.mulf %34, %41 : vector<8x32xf32>
    %c0_21 = arith.constant 0 : index
    %c0_22 = arith.constant 0 : index
    %43 = vector.load %arg9[%c0_21, %c0_22] : memref<4x32xf32, #tpu.memory_space<vmem>>, vector<1x32xf32>
    %c1 = arith.constant 1 : index
    %c0_23 = arith.constant 0 : index
    %44 = vector.load %arg9[%c1, %c0_23] : memref<4x32xf32, #tpu.memory_space<vmem>>, vector<1x32xf32>
    %c2 = arith.constant 2 : index
    %c0_24 = arith.constant 0 : index
    %45 = vector.load %arg9[%c2, %c0_24] : memref<4x32xf32, #tpu.memory_space<vmem>>, vector<1x32xf32>
    %c3 = arith.constant 3 : index
    %c0_25 = arith.constant 0 : index
    %46 = vector.load %arg9[%c3, %c0_25] : memref<4x32xf32, #tpu.memory_space<vmem>>, vector<1x32xf32>
    %47 = arith.truncf %42 : vector<8x32xf32> to vector<8x32xbf16>
    %c0_26 = arith.constant 0 : index
    %c0_27 = arith.constant 0 : index
    %48 = vector.load %arg5[%c0_26, %c0_27] : memref<32x32xbf16, #tpu.memory_space<vmem>>, vector<32x32xbf16>
    %cst_28 = arith.constant dense<0.000000e+00> : vector<8x32xf32>
    %49 = tpu.matmul %47, %48, %cst_28 {dimension_numbers = #tpu.dot_dimension_numbers<[1], [0], [0], [1], [0, 0, 1, 1], [], []>} : vector<8x32xbf16>, vector<32x32xbf16>, vector<8x32xf32> -> vector<8x32xf32>
    %cst_29 = arith.constant dense<0.000000e+00> : vector<8xf32>
    %50 = vector.multi_reduction <add>, %49, %cst_29 [1] : vector<8x32xf32> to vector<8xf32>
    %51 = vector.shape_cast %50 : vector<8xf32> to vector<8x1xf32>
    %cst_30 = arith.constant 3.200000e+01 : f32
    %52 = vector.broadcast %cst_30 : f32 to vector<8x1xf32>
    %53 = arith.divf %51, %52 : vector<8x1xf32>
    %54 = vector.broadcast %53 : vector<8x1xf32> to vector<8x32xf32>
    %55 = arith.subf %49, %54 : vector<8x32xf32>
    %56 = arith.mulf %55, %55 : vector<8x32xf32>
    %cst_31 = arith.constant dense<0.000000e+00> : vector<8xf32>
    %57 = vector.multi_reduction <add>, %56, %cst_31 [1] : vector<8x32xf32> to vector<8xf32>
    %58 = vector.shape_cast %57 : vector<8xf32> to vector<8x1xf32>
    %cst_32 = arith.constant 3.200000e+01 : f32
    %59 = vector.broadcast %cst_32 : f32 to vector<8x1xf32>
    %60 = arith.divf %58, %59 : vector<8x1xf32>
    %61 = vector.broadcast %53 : vector<8x1xf32> to vector<8x32xf32>
    %62 = arith.subf %49, %61 : vector<8x32xf32>
    %cst_33 = arith.constant 9.99999974E-6 : f32
    %63 = vector.broadcast %cst_33 : f32 to vector<8x1xf32>
    %64 = arith.addf %60, %63 : vector<8x1xf32>
    %65 = math.rsqrt %64 : vector<8x1xf32>
    %66 = vector.broadcast %65 : vector<8x1xf32> to vector<8x32xf32>
    %67 = arith.mulf %62, %66 : vector<8x32xf32>
    %68 = vector.broadcast %43 : vector<1x32xf32> to vector<8x32xf32>
    %69 = arith.mulf %67, %68 : vector<8x32xf32>
    %70 = vector.broadcast %44 : vector<1x32xf32> to vector<8x32xf32>
    %71 = arith.addf %69, %70 : vector<8x32xf32>
    %c0_34 = arith.constant 0 : index
    %c0_35 = arith.constant 0 : index
    %72 = vector.load %arg6[%c0_34, %c0_35] : memref<32x64xbf16, #tpu.memory_space<vmem>>, vector<32x64xbf16>
    %cst_36 = arith.constant dense<0.000000e+00> : vector<8x64xf32>
    %73 = tpu.matmul %4, %72, %cst_36 {dimension_numbers = #tpu.dot_dimension_numbers<[1], [0], [0], [1], [0, 0, 1, 1], [], []>} : vector<8x32xbf16>, vector<32x64xbf16>, vector<8x64xf32> -> vector<8x64xf32>
    %74 = arith.truncf %71 : vector<8x32xf32> to vector<8x32xbf16>
    %c0_37 = arith.constant 0 : index
    %c0_38 = arith.constant 0 : index
    %75 = vector.load %arg7[%c0_37, %c0_38] : memref<32x64xbf16, #tpu.memory_space<vmem>>, vector<32x64xbf16>
    %cst_39 = arith.constant dense<0.000000e+00> : vector<8x64xf32>
    %76 = tpu.matmul %74, %75, %cst_39 {dimension_numbers = #tpu.dot_dimension_numbers<[1], [0], [0], [1], [0, 0, 1, 1], [], []>} : vector<8x32xbf16>, vector<32x64xbf16>, vector<8x64xf32> -> vector<8x64xf32>
    %77 = arith.addf %73, %76 : vector<8x64xf32>
    %cst_40 = arith.constant 0.000000e+00 : f32
    %78 = vector.broadcast %cst_40 : f32 to vector<8x64xf32>
    %79 = arith.maximumf %77, %78 : vector<8x64xf32>
    %80 = arith.truncf %79 : vector<8x64xf32> to vector<8x64xbf16>
    %c0_41 = arith.constant 0 : index
    %c0_42 = arith.constant 0 : index
    %81 = vector.load %arg8[%c0_41, %c0_42] : memref<64x32xbf16, #tpu.memory_space<vmem>>, vector<64x32xbf16>
    %cst_43 = arith.constant dense<0.000000e+00> : vector<8x32xf32>
    %82 = tpu.matmul %80, %81, %cst_43 {dimension_numbers = #tpu.dot_dimension_numbers<[1], [0], [0], [1], [0, 0, 1, 1], [], []>} : vector<8x64xbf16>, vector<64x32xbf16>, vector<8x32xf32> -> vector<8x32xf32>
    %cst_44 = arith.constant dense<0.000000e+00> : vector<8xf32>
    %83 = vector.multi_reduction <add>, %82, %cst_44 [1] : vector<8x32xf32> to vector<8xf32>
    %84 = vector.shape_cast %83 : vector<8xf32> to vector<8x1xf32>
    %cst_45 = arith.constant 3.200000e+01 : f32
    %85 = vector.broadcast %cst_45 : f32 to vector<8x1xf32>
    %86 = arith.divf %84, %85 : vector<8x1xf32>
    %87 = vector.broadcast %86 : vector<8x1xf32> to vector<8x32xf32>
    %88 = arith.subf %82, %87 : vector<8x32xf32>
    %89 = arith.mulf %88, %88 : vector<8x32xf32>
    %cst_46 = arith.constant dense<0.000000e+00> : vector<8xf32>
    %90 = vector.multi_reduction <add>, %89, %cst_46 [1] : vector<8x32xf32> to vector<8xf32>
    %91 = vector.shape_cast %90 : vector<8xf32> to vector<8x1xf32>
    %cst_47 = arith.constant 3.200000e+01 : f32
    %92 = vector.broadcast %cst_47 : f32 to vector<8x1xf32>
    %93 = arith.divf %91, %92 : vector<8x1xf32>
    %94 = vector.broadcast %86 : vector<8x1xf32> to vector<8x32xf32>
    %95 = arith.subf %82, %94 : vector<8x32xf32>
    %cst_48 = arith.constant 9.99999974E-6 : f32
    %96 = vector.broadcast %cst_48 : f32 to vector<8x1xf32>
    %97 = arith.addf %93, %96 : vector<8x1xf32>
    %98 = math.rsqrt %97 : vector<8x1xf32>
    %99 = vector.broadcast %98 : vector<8x1xf32> to vector<8x32xf32>
    %100 = arith.mulf %95, %99 : vector<8x32xf32>
    %101 = vector.broadcast %45 : vector<1x32xf32> to vector<8x32xf32>
    %102 = arith.mulf %100, %101 : vector<8x32xf32>
    %103 = vector.broadcast %46 : vector<1x32xf32> to vector<8x32xf32>
    %104 = arith.addf %102, %103 : vector<8x32xf32>
    %105 = arith.addf %1, %104 : vector<8x32xf32>
    %c0_49 = arith.constant 0 : index
    %c0_50 = arith.constant 0 : index
    %c0_51 = arith.constant 0 : index
    %106 = vector.load %arg11[%c0_49, %c0_50, %c0_51] : memref<1x8x32xf32, #tpu.memory_space<vmem>>, vector<1x8x32xf32>
    %107 = vector.shape_cast %106 : vector<1x8x32xf32> to vector<8x32xf32>
    %108 = vector.shape_cast %105 : vector<8x32xf32> to vector<1x8x32xf32>
    tpu.vector_store %arg11[%c0_49, %c0_50, %c0_51], %108 {strides = array<i32>} : memref<1x8x32xf32, #tpu.memory_space<vmem>>, vector<1x8x32xf32>,
    return
  }
  func.func @transform_0(%arg0: i32) -> (i32, i32, i32) {
    %c0_i32 = arith.constant 0 : i32
    %c0_i32_0 = arith.constant 0 : i32
    %c0_i32_1 = arith.constant 0 : i32
    return %arg0, %c0_i32, %c0_i32_0 : i32, i32, i32
  }
  func.func @transform_1(%arg0: i32) -> (i32, i32, i32) {
    %c0_i32 = arith.constant 0 : i32
    %c0_i32_0 = arith.constant 0 : i32
    %c0_i32_1 = arith.constant 0 : i32
    return %arg0, %c0_i32, %c0_i32_0 : i32, i32, i32
  }
  func.func @transform_2(%arg0: i32) -> (i32, i32) {
    %c0_i32 = arith.constant 0 : i32
    %c0_i32_0 = arith.constant 0 : i32
    %c0_i32_1 = arith.constant 0 : i32
    return %c0_i32, %c0_i32_0 : i32, i32
  }
  func.func @transform_3(%arg0: i32) -> (i32, i32) {
    %c0_i32 = arith.constant 0 : i32
    %c0_i32_0 = arith.constant 0 : i32
    %c0_i32_1 = arith.constant 0 : i32
    return %c0_i32, %c0_i32_0 : i32, i32
  }
  func.func @transform_4(%arg0: i32) -> (i32, i32) {
    %c0_i32 = arith.constant 0 : i32
    %c0_i32_0 = arith.constant 0 : i32
    %c0_i32_1 = arith.constant 0 : i32
    return %c0_i32, %c0_i32_0 : i32, i32
  }
  func.func @transform_5(%arg0: i32) -> (i32, i32) {
    %c0_i32 = arith.constant 0 : i32
    %c0_i32_0 = arith.constant 0 : i32
    %c0_i32_1 = arith.constant 0 : i32
    return %c0_i32, %c0_i32_0 : i32, i32
  }
  func.func @transform_6(%arg0: i32) -> (i32, i32) {
    %c0_i32 = arith.constant 0 : i32
    %c0_i32_0 = arith.constant 0 : i32
    %c0_i32_1 = arith.constant 0 : i32
    return %c0_i32, %c0_i32_0 : i32, i32
  }
  func.func @transform_7(%arg0: i32) -> (i32, i32) {
    %c0_i32 = arith.constant 0 : i32
    %c0_i32_0 = arith.constant 0 : i32
    %c0_i32_1 = arith.constant 0 : i32
    return %c0_i32, %c0_i32_0 : i32, i32
  }
  func.func @transform_8(%arg0: i32) -> (i32, i32) {
    %c0_i32 = arith.constant 0 : i32
    %c0_i32_0 = arith.constant 0 : i32
    %c0_i32_1 = arith.constant 0 : i32
    return %c0_i32, %c0_i32_0 : i32, i32
  }
  func.func @transform_9(%arg0: i32) -> (i32, i32) {
    %c0_i32 = arith.constant 0 : i32
    %c0_i32_0 = arith.constant 0 : i32
    %c0_i32_1 = arith.constant 0 : i32
    return %c0_i32, %c0_i32_0 : i32, i32
  }
  func.func @transform_10(%arg0: i32) -> (i32, i32, i32) {
    %c0_i32 = arith.constant 0 : i32
    %c0_i32_0 = arith.constant 0 : i32
    %c0_i32_1 = arith.constant 0 : i32
    return %arg0, %c0_i32, %c0_i32_0 : i32, i32, i32
  }
}

</mosaic_0001>

<llo_original>
// kernel: feature_transformer.5
$region0: #{feature_transformer.5}
  #allocation0 [shape = 'u32[]', space=smem, size = 0x4, offset = 0x4, fixed_abs, tag = 'smem constant byte address 0x4 - core index']
  #allocation1 [shape = 'u32[144,128]{1,0:T(1,128)}', space=vmem, size = 0x12000, scoped, tag = 'internal scratch']
  %s0 = inlined_call_operand.vmem [shape: f32[2,8,32], index: 0, kind: input, shape index: {}, may-alias: {0,1}]
  %s1 = inlined_call_operand.vmem [shape: f32[2,8,32], index: 1, kind: input, shape index: {}, may-alias: {0,1}]
  %s2 = inlined_call_operand.vmem [shape: bf16[32,32], index: 2, kind: input, shape index: {}]
  %s3 = inlined_call_operand.vmem [shape: bf16[32,64], index: 3, kind: input, shape index: {}]
  %s4 = inlined_call_operand.vmem [shape: bf16[32,32], index: 4, kind: input, shape index: {}]
  %s5 = inlined_call_operand.vmem [shape: bf16[32,64], index: 5, kind: input, shape index: {}]
  %s6 = inlined_call_operand.vmem [shape: bf16[32,64], index: 6, kind: input, shape index: {}]
  %s7 = inlined_call_operand.vmem [shape: bf16[64,32], index: 7, kind: input, shape index: {}]
  %s8 = inlined_call_operand.vmem [shape: f32[4,32], index: 8, kind: input, shape index: {}]
  %s9 = inlined_call_operand.vmem [shape: bf16[32,32], index: 9, kind: input, shape index: {}]
  %s10 = inlined_call_operand.vmem [shape: f32[2,8,32], index: 10, kind: output, shape index: {}]
  %s11 = sld [smem:[#allocation0]]
  $region73: #{feature_transformer.5} parent=0
    _
  %s13 = ssub.s32 1, %s11
  %s14 = scalar_select 0, %s13, %s11
  loop: start=0, step=1, limit=4
  $region2: #{feature_transformer.5} parent=0 // loop_pre_header
    _
  $region3: #{feature_transformer.5} parent=0 // loop_header
    %s16 = sphi 0, %s20
    %p17 = scmp.ge.s32.totalorder %s16, 4
    %s26 = sphi 0, %s28
    %s29 = sphi 0, %s26
    %s30 = sphi 0, %s29
    %s46 = sphi 0, %s30
    %s52 = sphi 0, %s54
    %s55 = sphi 0, %s52
    %s56 = sphi 0, %s55
    %s72 = sphi 0, %s56
    %s76 = sphi 0, %s76
    %s78 = sphi 0, %s76
    %s79 = sphi 0, %s78
    %s93 = sphi 0, %s79
    %s97 = sphi 0, %s97
    %s99 = sphi 0, %s97
    %s100 = sphi 0, %s99
    %s114 = sphi 0, %s100
    %s118 = sphi 0, %s118
    %s120 = sphi 0, %s118
    %s121 = sphi 0, %s120
    %s135 = sphi 0, %s121
    %s139 = sphi 0, %s139
    %s141 = sphi 0, %s139
    %s142 = sphi 0, %s141
    %s156 = sphi 0, %s142
    %s160 = sphi 0, %s160
    %s162 = sphi 0, %s160
    %s163 = sphi 0, %s162
    %s177 = sphi 0, %s163
    %s181 = sphi 0, %s181
    %s183 = sphi 0, %s181
    %s184 = sphi 0, %s183
    %s198 = sphi 0, %s184
    %s202 = sphi 0, %s202
    %s204 = sphi 0, %s202
    %s205 = sphi 0, %s204
    %s219 = sphi 0, %s205
    %s223 = sphi 0, %s223
    %s225 = sphi 0, %s223
    %s226 = sphi 0, %s225
    %s240 = sphi 0, %s226
    %s246 = sphi 0, %s248
    %s249 = sphi 0, %s246
    %s250 = sphi 0, %s249
    %s266 = sphi 0, %s250
  $region4: #{feature_transformer.5} parent=0 // loop_header_branch
    %19 = sbr.rel (%p17) target = $region8
  $region5: #{feature_transformer.5} parent=0 // loop_body
    %s21 = ssub.s32 %s16, 1
    %s22 = ssub.s32 %s16, 2
    %s23 = sadd.s32 %s16, 1
    %s24 = ssub.s32 %s16, %s23
    %p25 = scmp.eq.s32.totalorder %s24, 0
    %s27 = sadd.s32 %s26, 1
    %s28 = scalar_select %p25, %s26, %s27
    %p31 = pneg %p25
    %p32 = scmp.eq.s32.totalorder %s16, 1
    %p33 = por %p31, %p32
    %p34 = scmp.ne.s32.totalorder %s26, %s29
    %p35 = scmp.eq.s32.totalorder %s16, 0
    %p36 = por %p34, %p35
    %p37 = scmp.ne.s32.totalorder %s26, %s29
    %p38 = scmp.eq.s32.totalorder %s21, 1
    %p39 = por %p37, %p38
    %p40 = scmp.ne.s32.totalorder %s29, %s30
    %p41 = scmp.eq.s32.totalorder %s21, 0
    %p42 = por %p40, %p41
    %p43 = scmp.ne.s32.totalorder %s29, %s30
    %p44 = scmp.eq.s32.totalorder %s22, 1
    %p45 = por %p43, %p44
    %p47 = scmp.ne.s32.totalorder %s30, %s46
    %p48 = scmp.eq.s32.totalorder %s22, 0
    %p49 = por %p47, %p48
    %s50 = ssub.s32 %s16, %s23
    %p51 = scmp.eq.s32.totalorder %s50, 0
    %s53 = sadd.s32 %s52, 1
    %s54 = scalar_select %p51, %s52, %s53
    %p57 = pneg %p51
    %p58 = scmp.eq.s32.totalorder %s16, 1
    %p59 = por %p57, %p58
    %p60 = scmp.ne.s32.totalorder %s52, %s55
    %p61 = scmp.eq.s32.totalorder %s16, 0
    %p62 = por %p60, %p61
    %p63 = scmp.ne.s32.totalorder %s52, %s55
    %p64 = scmp.eq.s32.totalorder %s21, 1
    %p65 = por %p63, %p64
    %p66 = scmp.ne.s32.totalorder %s55, %s56
    %p67 = scmp.eq.s32.totalorder %s21, 0
    %p68 = por %p66, %p67
    %p69 = scmp.ne.s32.totalorder %s55, %s56
    %p70 = scmp.eq.s32.totalorder %s22, 1
    %p71 = por %p69, %p70
    %p73 = scmp.ne.s32.totalorder %s56, %s72
    %p74 = scmp.eq.s32.totalorder %s22, 0
    %p75 = por %p73, %p74
    %s77 = sadd.s32 %s76, 1
    %p80 = scmp.eq.s32.totalorder %s16, 1
    %p81 = scmp.ne.s32.totalorder %s76, %s78
    %p82 = scmp.eq.s32.totalorder %s16, 0
    %p83 = por %p81, %p82
    %p84 = scmp.ne.s32.totalorder %s76, %s78
    %p85 = scmp.eq.s32.totalorder %s21, 1
    %p86 = por %p84, %p85
    %p87 = scmp.ne.s32.totalorder %s78, %s79
    %p88 = scmp.eq.s32.totalorder %s21, 0
    %p89 = por %p87, %p88
    %p90 = scmp.ne.s32.totalorder %s78, %s79
    %p91 = scmp.eq.s32.totalorder %s22, 1
    %p92 = por %p90, %p91
    %p94 = scmp.ne.s32.totalorder %s79, %s93
    %p95 = scmp.eq.s32.totalorder %s22, 0
    %p96 = por %p94, %p95
    %s98 = sadd.s32 %s97, 1
    %p101 = scmp.eq.s32.totalorder %s16, 1
    %p102 = scmp.ne.s32.totalorder %s97, %s99
    %p103 = scmp.eq.s32.totalorder %s16, 0
    %p104 = por %p102, %p103
    %p105 = scmp.ne.s32.totalorder %s97, %s99
    %p106 = scmp.eq.s32.totalorder %s21, 1
    %p107 = por %p105, %p106
    %p108 = scmp.ne.s32.totalorder %s99, %s100
    %p109 = scmp.eq.s32.totalorder %s21, 0
    %p110 = por %p108, %p109
    %p111 = scmp.ne.s32.totalorder %s99, %s100
    %p112 = scmp.eq.s32.totalorder %s22, 1
    %p113 = por %p111, %p112
    %p115 = scmp.ne.s32.totalorder %s100, %s114
    %p116 = scmp.eq.s32.totalorder %s22, 0
    %p117 = por %p115, %p116
    %s119 = sadd.s32 %s118, 1
    %p122 = scmp.eq.s32.totalorder %s16, 1
    %p123 = scmp.ne.s32.totalorder %s118, %s120
    %p124 = scmp.eq.s32.totalorder %s16, 0
    %p125 = por %p123, %p124
    %p126 = scmp.ne.s32.totalorder %s118, %s120
    %p127 = scmp.eq.s32.totalorder %s21, 1
    %p128 = por %p126, %p127
    %p129 = scmp.ne.s32.totalorder %s120, %s121
    %p130 = scmp.eq.s32.totalorder %s21, 0
    %p131 = por %p129, %p130
    %p132 = scmp.ne.s32.totalorder %s120, %s121
    %p133 = scmp.eq.s32.totalorder %s22, 1
    %p134 = por %p132, %p133
    %p136 = scmp.ne.s32.totalorder %s121, %s135
    %p137 = scmp.eq.s32.totalorder %s22, 0
    %p138 = por %p136, %p137
    %s140 = sadd.s32 %s139, 1
    %p143 = scmp.eq.s32.totalorder %s16, 1
    %p144 = scmp.ne.s32.totalorder %s139, %s141
    %p145 = scmp.eq.s32.totalorder %s16, 0
    %p146 = por %p144, %p145
    %p147 = scmp.ne.s32.totalorder %s139, %s141
    %p148 = scmp.eq.s32.totalorder %s21, 1
    %p149 = por %p147, %p148
    %p150 = scmp.ne.s32.totalorder %s141, %s142
    %p151 = scmp.eq.s32.totalorder %s21, 0
    %p152 = por %p150, %p151
    %p153 = scmp.ne.s32.totalorder %s141, %s142
    %p154 = scmp.eq.s32.totalorder %s22, 1
    %p155 = por %p153, %p154
    %p157 = scmp.ne.s32.totalorder %s142, %s156
    %p158 = scmp.eq.s32.totalorder %s22, 0
    %p159 = por %p157, %p158
    %s161 = sadd.s32 %s160, 1
    %p164 = scmp.eq.s32.totalorder %s16, 1
    %p165 = scmp.ne.s32.totalorder %s160, %s162
    %p166 = scmp.eq.s32.totalorder %s16, 0
    %p167 = por %p165, %p166
    %p168 = scmp.ne.s32.totalorder %s160, %s162
    %p169 = scmp.eq.s32.totalorder %s21, 1
    %p170 = por %p168, %p169
    %p171 = scmp.ne.s32.totalorder %s162, %s163
    %p172 = scmp.eq.s32.totalorder %s21, 0
    %p173 = por %p171, %p172
    %p174 = scmp.ne.s32.totalorder %s162, %s163
    %p175 = scmp.eq.s32.totalorder %s22, 1
    %p176 = por %p174, %p175
    %p178 = scmp.ne.s32.totalorder %s163, %s177
    %p179 = scmp.eq.s32.totalorder %s22, 0
    %p180 = por %p178, %p179
    %s182 = sadd.s32 %s181, 1
    %p185 = scmp.eq.s32.totalorder %s16, 1
    %p186 = scmp.ne.s32.totalorder %s181, %s183
    %p187 = scmp.eq.s32.totalorder %s16, 0
    %p188 = por %p186, %p187
    %p189 = scmp.ne.s32.totalorder %s181, %s183
    %p190 = scmp.eq.s32.totalorder %s21, 1
    %p191 = por %p189, %p190
    %p192 = scmp.ne.s32.totalorder %s183, %s184
    %p193 = scmp.eq.s32.totalorder %s21, 0
    %p194 = por %p192, %p193
    %p195 = scmp.ne.s32.totalorder %s183, %s184
    %p196 = scmp.eq.s32.totalorder %s22, 1
    %p197 = por %p195, %p196
    %p199 = scmp.ne.s32.totalorder %s184, %s198
    %p200 = scmp.eq.s32.totalorder %s22, 0
    %p201 = por %p199, %p200
    %s203 = sadd.s32 %s202, 1
    %p206 = scmp.eq.s32.totalorder %s16, 1
    %p207 = scmp.ne.s32.totalorder %s202, %s204
    %p208 = scmp.eq.s32.totalorder %s16, 0
    %p209 = por %p207, %p208
    %p210 = scmp.ne.s32.totalorder %s202, %s204
    %p211 = scmp.eq.s32.totalorder %s21, 1
    %p212 = por %p210, %p211
    %p213 = scmp.ne.s32.totalorder %s204, %s205
    %p214 = scmp.eq.s32.totalorder %s21, 0
    %p215 = por %p213, %p214
    %p216 = scmp.ne.s32.totalorder %s204, %s205
    %p217 = scmp.eq.s32.totalorder %s22, 1
    %p218 = por %p216, %p217
    %p220 = scmp.ne.s32.totalorder %s205, %s219
    %p221 = scmp.eq.s32.totalorder %s22, 0
    %p222 = por %p220, %p221
    %s224 = sadd.s32 %s223, 1
    %p227 = scmp.eq.s32.totalorder %s16, 1
    %p228 = scmp.ne.s32.totalorder %s223, %s225
    %p229 = scmp.eq.s32.totalorder %s16, 0
    %p230 = por %p228, %p229
    %p231 = scmp.ne.s32.totalorder %s223, %s225
    %p232 = scmp.eq.s32.totalorder %s21, 1
    %p233 = por %p231, %p232
    %p234 = scmp.ne.s32.totalorder %s225, %s226
    %p235 = scmp.eq.s32.totalorder %s21, 0
    %p236 = por %p234, %p235
    %p237 = scmp.ne.s32.totalorder %s225, %s226
    %p238 = scmp.eq.s32.totalorder %s22, 1
    %p239 = por %p237, %p238
    %p241 = scmp.ne.s32.totalorder %s226, %s240
    %p242 = scmp.eq.s32.totalorder %s22, 0
    %p243 = por %p241, %p242
    %s244 = ssub.s32 %s16, %s23
    %p245 = scmp.eq.s32.totalorder %s244, 0
    %s247 = sadd.s32 %s246, 1
    %s248 = scalar_select %p245, %s246, %s247
    %p251 = pneg %p245
    %p252 = scmp.eq.s32.totalorder %s16, 1
    %p253 = por %p251, %p252
    %p254 = scmp.ne.s32.totalorder %s246, %s249
    %p255 = scmp.eq.s32.totalorder %s16, 0
    %p256 = por %p254, %p255
    %p257 = scmp.ne.s32.totalorder %s246, %s249
    %p258 = scmp.eq.s32.totalorder %s21, 1
    %p259 = por %p257, %p258
    %p260 = scmp.ne.s32.totalorder %s249, %s250
    %p261 = scmp.eq.s32.totalorder %s21, 0
    %p262 = por %p260, %p261
    %p263 = scmp.ne.s32.totalorder %s249, %s250
    %p264 = scmp.eq.s32.totalorder %s22, 1
    %p265 = por %p263, %p264
    %p267 = scmp.ne.s32.totalorder %s250, %s266
    %p268 = scmp.eq.s32.totalorder %s22, 0
    %p269 = por %p267, %p268
    %p270 = scmp.le.s32.totalorder 1, %s16
    %p271 = scmp.lt.s32.totalorder %s16, 3
    %p272 = pnand %p270, %p271
    %p273 = pneg %p272
    // Predicated region
    $region9: #{feature_transformer.5} parent=5 // pred_check
      _
    $region10: #{feature_transformer.5} parent=5 // pred_check_branch
      %275 = sbr.rel (%p272) target = $region12
    $region11: #{feature_transformer.5} parent=5 // pred_region
      %s276 = ssub.s32 %s16, 1
      // Predicated region
      $region13: #{feature_transformer.5} parent=11 // pred_check
        %p277 = pneg %p89
      $region14: #{feature_transformer.5} parent=11 // pred_check_branch
        %279 = sbr.rel (%p277) target = $region16
      $region15: #{feature_transformer.5} parent=11 // pred_region
        _
      $region16: #{feature_transformer.5} parent=11 // pred_fallthru
        _
      // Predicated region
      $region17: #{feature_transformer.5} parent=11 // pred_check
        %p280 = pneg %p110
      $region18: #{feature_transformer.5} parent=11 // pred_check_branch
        %282 = sbr.rel (%p280) target = $region20
      $region19: #{feature_transformer.5} parent=11 // pred_region
        _
      $region20: #{feature_transformer.5} parent=11 // pred_fallthru
        _
      // Predicated region
      $region21: #{feature_transformer.5} parent=11 // pred_check
        %p283 = pneg %p131
      $region22: #{feature_transformer.5} parent=11 // pred_check_branch
        %285 = sbr.rel (%p283) target = $region24
      $region23: #{feature_transformer.5} parent=11 // pred_region
        _
      $region24: #{feature_transformer.5} parent=11 // pred_fallthru
        _
      // Predicated region
      $region25: #{feature_transformer.5} parent=11 // pred_check
        %p286 = pneg %p152
      $region26: #{feature_transformer.5} parent=11 // pred_check_branch
        %288 = sbr.rel (%p286) target = $region28
      $region27: #{feature_transformer.5} parent=11 // pred_region
        _
      $region28: #{feature_transformer.5} parent=11 // pred_fallthru
        _
      // Predicated region
      $region29: #{feature_transformer.5} parent=11 // pred_check
        %p289 = pneg %p173
      $region30: #{feature_transformer.5} parent=11 // pred_check_branch
        %291 = sbr.rel (%p289) target = $region32
      $region31: #{feature_transformer.5} parent=11 // pred_region
        _
      $region32: #{feature_transformer.5} parent=11 // pred_fallthru
        _
      // Predicated region
      $region33: #{feature_transformer.5} parent=11 // pred_check
        %p292 = pneg %p194
      $region34: #{feature_transformer.5} parent=11 // pred_check_branch
        %294 = sbr.rel (%p292) target = $region36
      $region35: #{feature_transformer.5} parent=11 // pred_region
        _
      $region36: #{feature_transformer.5} parent=11 // pred_fallthru
        _
      // Predicated region
      $region37: #{feature_transformer.5} parent=11 // pred_check
        %p295 = pneg %p215
      $region38: #{feature_transformer.5} parent=11 // pred_check_branch
        %297 = sbr.rel (%p295) target = $region40
      $region39: #{feature_transformer.5} parent=11 // pred_region
        _
      $region40: #{feature_transformer.5} parent=11 // pred_fallthru
        _
      // Predicated region
      $region41: #{feature_transformer.5} parent=11 // pred_check
        %p298 = pneg %p236
      $region42: #{feature_transformer.5} parent=11 // pred_check_branch
        %300 = sbr.rel (%p298) target = $region44
      $region43: #{feature_transformer.5} parent=11 // pred_region
        _
      $region44: #{feature_transformer.5} parent=11 // pred_fallthru
        _
    $region12: #{feature_transformer.5} parent=5 // pred_fallthru
      _
    %p301 = scmp.lt.s32.totalorder %s16, 2
    // Predicated region
    $region45: #{feature_transformer.5} parent=5 // pred_check
      %p302 = pneg %p301
    $region46: #{feature_transformer.5} parent=5 // pred_check_branch
      %304 = sbr.rel (%p302) target = $region48
    $region47: #{feature_transformer.5} parent=5 // pred_region
      // Predicated region
      $region49: #{feature_transformer.5} parent=47 // pred_check
        %p305 = pneg %p36
      $region50: #{feature_transformer.5} parent=47 // pred_check_branch
        %307 = sbr.rel (%p305) target = $region52
      $region51: #{feature_transformer.5} parent=47 // pred_region
        %p308 = scmp.lt.s32.totalorder %s16, 1
        %s309 = scalar_select %p308, %s16, 1
        %s310 = smul.addr %s309, 8
        %s311 = scalar_lea.vmem %s0, %s310
      $region52: #{feature_transformer.5} parent=47 // pred_fallthru
        _
      // Predicated region
      $region53: #{feature_transformer.5} parent=47 // pred_check
        %p312 = pneg %p62
      $region54: #{feature_transformer.5} parent=47 // pred_check_branch
        %314 = sbr.rel (%p312) target = $region56
      $region55: #{feature_transformer.5} parent=47 // pred_region
        %p315 = scmp.lt.s32.totalorder %s16, 1
        %s316 = scalar_select %p315, %s16, 1
        %s317 = smul.addr %s316, 8
        %s318 = scalar_lea.vmem %s1, %s317
      $region56: #{feature_transformer.5} parent=47 // pred_fallthru
        _
    $region48: #{feature_transformer.5} parent=5 // pred_fallthru
      _
    %p319 = scmp.le.s32.totalorder 1, %s16
    %p320 = scmp.lt.s32.totalorder %s16, 3
    %p321 = pnand %p319, %p320
    %p322 = pneg %p321
    // Predicated region
    $region57: #{feature_transformer.5} parent=5 // pred_check
      _
    $region58: #{feature_transformer.5} parent=5 // pred_check_branch
      %324 = sbr.rel (%p321) target = $region60
    $region59: #{feature_transformer.5} parent=5 // pred_region
      %s325 = ssub.s32 %s16, 1
      %p326 = scmp.lt.s32.totalorder %s21, 1
      %s327 = scalar_select %p326, %s21, 1
      %s328 = smul.addr %s327, 8
      %s329 = scalar_lea.vmem %s0, %s328
      %p330 = pneg %p42
      %p331 = pneg %p39
      %p332 = scmp.lt.s32.totalorder %s21, 1
      %s333 = scalar_select %p332, %s21, 1
      %s334 = smul.addr %s333, 8
      %s335 = scalar_lea.vmem %s1, %s334
      %p336 = pneg %p68
      %p337 = pneg %p65
      %p338 = pneg %p89
      %p339 = pneg %p86
      %p340 = pneg %p110
      %p341 = pneg %p107
      %p342 = pneg %p131
      %p343 = pneg %p128
      %p344 = pneg %p152
      %p345 = pneg %p149
      %p346 = pneg %p173
      %p347 = pneg %p170
      %p348 = pneg %p194
      %p349 = pneg %p191
      %p350 = pneg %p215
      %p351 = pneg %p212
      %p352 = pneg %p236
      %p353 = pneg %p233
      %p354 = pneg %p262
      %p355 = pneg %p259
      %p356 = scmp.lt.s32.totalorder %s21, 1
      %s357 = scalar_select %p356, %s21, 1
      %s358 = smul.addr %s357, 8
      %s359 = scalar_lea.vmem %s10, %s358
      %p360 = scmp.lt.s32.totalorder %s21, 1
      %s361 = scalar_select %p360, %s21, 1
      %s362 = smul.addr %s361, 8
      %s363 = scalar_lea.vmem %s0, %s362
      %p364 = scmp.lt.s32.totalorder %s21, 1
      %s365 = scalar_select %p364, %s21, 1
      %s366 = smul.addr %s365, 8
      %s367 = scalar_lea.vmem %s1, %s366
      %p368 = scmp.lt.s32.totalorder %s21, 1
      %s369 = scalar_select %p368, %s21, 1
      %s370 = smul.addr %s369, 8
      %s371 = scalar_lea.vmem %s10, %s370
      %v373 = vld [vmem:[%s363] sm:$0xff]
      %v374 = vld [vmem:[%s367] sm:$0xff]
      %v375 = vpack.c.bf16 %v373, %v373
      %v376 = vpack.c.bf16 %v374, %v374
      %v377 = vld [vmem:[%s2] sm:$0xf]
      %v378 = vld [vmem:[%s2 + $0x4] sm:$0xf]
      %v379 = vld [vmem:[%s2 + $0x8] sm:$0xf]
      %v380 = vld [vmem:[%s2 + $0xc] sm:$0xf]
      %v385 = vunpack.c.l.b16 %v377
      %v386 = vunpack.c.l.b16 %v378
      %v387 = vunpack.c.l.b16 %v379
      %v388 = vunpack.c.l.b16 %v380
      %v389 = vpack.c.b16 %v386, %v385
      %v390 = vpack.c.b16 %v388, %v387
      %vm393 = vcmask 261120
      %v395 = vsel %vm393, %v375, 0
      %397 = vmatprep.subr.bf16.mxu0 0
      %398 = vmatpush1.bf16.msra.mxu0 0
      %399 = vmatprep.subr.bf16.mxu0 0
      %400 = vmatpush1.bf16.msra.mxu0 0
      %401 = vmatprep.subr.bf16.mxu0 0
      %402 = vmatpush1.bf16.msra.mxu0 0
      %403 = vmatprep.subr.bf16.mxu0 0
      %404 = vmatpush1.bf16.msra.mxu0 0
      %405 = vmatprep.subr.bf16.mxu0 0
      %406 = vmatpush1.bf16.msra.mxu0 0
      %407 = vmatprep.subr.bf16.mxu0 0
      %408 = vmatpush1.bf16.msra.mxu0 0
      %409 = vmatprep.subr.bf16.mxu0 0
      %410 = vmatpush1.bf16.msra.mxu0 %v390
      %411 = vmatprep.subr.bf16.mxu0 0
      %412 = vmatpush1.bf16.msra.mxu0 %v389
      %413 = vmatprep.subr.bf16.mxu0 0
      %414 = vmatpush2.bf16.msra.mxu0 0
      %415 = vmatprep.subr.bf16.mxu0 0
      %416 = vmatpush2.bf16.msra.mxu0 0
      %417 = vmatprep.subr.bf16.mxu0 0
      %418 = vmatpush2.bf16.msra.mxu0 0
      %419 = vmatprep.subr.bf16.mxu0 0
      %420 = vmatpush2.bf16.msra.mxu0 0
      %421 = vmatprep.subr.bf16.mxu0 0
      %422 = vmatpush2.bf16.msra.mxu0 0
      %423 = vmatprep.subr.bf16.mxu0 0
      %424 = vmatpush2.bf16.msra.mxu0 0
      %425 = vmatprep.subr.bf16.mxu0 0
      %426 = vmatpush2.bf16.msra.mxu0 0
      %427 = vmatprep.subr.bf16.mxu0 0
      %428 = vmatpush2.bf16.msra.mxu0 0
      %429 = vmatprep.mubr.bf16.mxu0 0
      %430 = vmatmul.mubr.bf16.gmra.mxu0 %v395
      %v431 = vpop.f32.mrf.mxu0
      %v432 = vadd.f32 0.0, %v431
      %v433 = vpop.f32.mrf.mxu0
      %v434 = vpop.f32.mrf.mxu0
      %v435 = vpop.f32.mrf.mxu0
      %436 = vdwg.mxu0
      %v437 = vld [vmem:[%s3] sm:$0xf]
      %v438 = vld [vmem:[%s3 + $0x4] sm:$0xf]
      %v439 = vld [vmem:[%s3 + $0x8] sm:$0xf]
      %v440 = vld [vmem:[%s3 + $0xc] sm:$0xf]
      %v445 = vunpack.c.l.b16 %v437
      %v446 = vunpack.c.l.b16 %v438
      %v447 = vunpack.c.l.b16 %v439
      %v448 = vunpack.c.l.b16 %v440
      %v449 = vpack.c.b16 %v446, %v445
      %v450 = vpack.c.b16 %v448, %v447
      %v454 = vsel %vm393, %v376, 0
      %456 = vmatprep.subr.bf16.mxu0 0
      %457 = vmatpush1.bf16.msra.mxu0 0
      %458 = vmatprep.subr.bf16.mxu0 0
      %459 = vmatpush1.bf16.msra.mxu0 0
      %460 = vmatprep.subr.bf16.mxu0 0
      %461 = vmatpush1.bf16.msra.mxu0 0
      %462 = vmatprep.subr.bf16.mxu0 0
      %463 = vmatpush1.bf16.msra.mxu0 0
      %464 = vmatprep.subr.bf16.mxu0 0
      %465 = vmatpush1.bf16.msra.mxu0 0
      %466 = vmatprep.subr.bf16.mxu0 0
      %467 = vmatpush1.bf16.msra.mxu0 0
      %468 = vmatprep.subr.bf16.mxu0 0
      %469 = vmatpush1.bf16.msra.mxu0 %v450
      %470 = vmatprep.subr.bf16.mxu0 0
      %471 = vmatpush1.bf16.msra.mxu0 %v449
      %472 = vmatprep.subr.bf16.mxu0 0
      %473 = vmatpush2.bf16.msra.mxu0 0
      %474 = vmatprep.subr.bf16.mxu0 0
      %475 = vmatpush2.bf16.msra.mxu0 0
      %476 = vmatprep.subr.bf16.mxu0 0
      %477 = vmatpush2.bf16.msra.mxu0 0
      %478 = vmatprep.subr.bf16.mxu0 0
      %479 = vmatpush2.bf16.msra.mxu0 0
      %480 = vmatprep.subr.bf16.mxu0 0
      %481 = vmatpush2.bf16.msra.mxu0 0
      %482 = vmatprep.subr.bf16.mxu0 0
      %483 = vmatpush2.bf16.msra.mxu0 0
      %484 = vmatprep.subr.bf16.mxu0 0
      %485 = vmatpush2.bf16.msra.mxu0 0
      %486 = vmatprep.subr.bf16.mxu0 0
      %487 = vmatpush2.bf16.msra.mxu0 0
      %488 = vmatprep.mubr.bf16.mxu0 0
      %489 = vmatmul.mubr.bf16.gmra.mxu0 %v454
      %v490 = vpop.f32.mrf.mxu0
      %v491 = vadd.f32 0.0, %v490
      %v492 = vpop.f32.mrf.mxu0
      %v493 = vpop.f32.mrf.mxu0
      %v494 = vpop.f32.mrf.mxu0
      %495 = vdwg.mxu0
      %vm496 = vcmp.gt.f32.partialorder %v432, 0.0
      %v497 = vadd.f32 %v432, 1.0
      %v498 = vmul.f32 %v432, 1.442695
      %v499 = vpow.pop %v498
      %v500 = vsel %vm496, %v497, %v499
      %vm501 = vcmp.gt.f32.partialorder %v491, 0.0
      %v502 = vadd.f32 %v491, 1.0
      %v503 = vmul.f32 %v491, 1.442695
      %v504 = vpow.pop %v503
      %v505 = vsel %vm501, %v502, %v504
      %v506 = vld [vmem:[%s9] sm:$0xf]
      %v507 = vld [vmem:[%s9 + $0x4] sm:$0xf]
      %v508 = vld [vmem:[%s9 + $0x8] sm:$0xf]
      %v509 = vld [vmem:[%s9 + $0xc] sm:$0xf]
      %v510 = vpack.c.bf16 %v505, %v505
      %v511 = vpack.c.bf16 %v491, %v491
      %512 = vxpose.xlu0.c.b16.start [1/8] %v510, 128
      %513 = vxpose.xlu0.c.b16.cont [2/8] 0, 128
      %514 = vxpose.xlu0.c.b16.cont [3/8] 0, 128
      %515 = vxpose.xlu0.c.b16.cont [4/8] 0, 128
      %516 = vxpose.xlu0.c.b16.cont [5/8] 0, 128
      %517 = vxpose.xlu0.c.b16.cont [6/8] 0, 128
      %518 = vxpose.xlu0.c.b16.cont [7/8] 0, 128
      %519 = vxpose.xlu0.c.b16.end [8/8] 0, 128
      %v520 = vpop.trf.xlu0
      %v521 = vpop.trf.xlu0
      %v522 = vpop.trf.xlu0
      %v523 = vpop.trf.xlu0
      %v524 = vpop.trf.xlu0
      %v525 = vpop.trf.xlu0
      %v526 = vpop.trf.xlu0
      %v527 = vpop.trf.xlu0
      %529 = vrot.lane.b32.xlu0 %v511, 96
      %v530 = vpop.permute.xlu0 %529
      %vm531 = vcmask 64512
      %v533 = vsel %vm531, %v520, 0
      %v536 = vsel %vm531, %v521, 0
      %vm538 = vcmask 1043456
      %v540 = vsel %vm538, %v530, 0
      %542 = vmatprep.subr.bf16.mxu0 0
      %543 = vmatpush1.bf16.msra.mxu0 0
      %544 = vmatprep.subr.bf16.mxu0 0
      %545 = vmatpush1.bf16.msra.mxu0 0
      %546 = vmatprep.subr.bf16.mxu0 0
      %547 = vmatpush1.bf16.msra.mxu0 0
      %548 = vmatprep.subr.bf16.mxu0 0
      %549 = vmatpush1.bf16.msra.mxu0 0
      %550 = vmatprep.subr.bf16.mxu0 0
      %551 = vmatpush1.bf16.msra.mxu0 0
      %552 = vmatprep.subr.bf16.mxu0 0
      %553 = vmatpush1.bf16.msra.mxu0 0
      %554 = vmatprep.subr.bf16.mxu0 0
      %555 = vmatpush1.bf16.msra.mxu0 0
      %556 = vmatprep.subr.bf16.mxu0 0
      %557 = vmatpush1.bf16.msra.mxu0 %v540
      %558 = vmatprep.subr.bf16.mxu0 0
      %559 = vmatpush2.bf16.msra.mxu0 0
      %560 = vmatprep.subr.bf16.mxu0 0
      %561 = vmatpush2.bf16.msra.mxu0 0
      %562 = vmatprep.subr.bf16.mxu0 0
      %563 = vmatpush2.bf16.msra.mxu0 0
      %564 = vmatprep.subr.bf16.mxu0 0
      %565 = vmatpush2.bf16.msra.mxu0 0
      %566 = vmatprep.subr.bf16.mxu0 0
      %567 = vmatpush2.bf16.msra.mxu0 0
      %568 = vmatprep.subr.bf16.mxu0 0
      %569 = vmatpush2.bf16.msra.mxu0 0
      %570 = vmatprep.subr.bf16.mxu0 0
      %571 = vmatpush2.bf16.msra.mxu0 0
      %572 = vmatprep.subr.bf16.mxu0 0
      %573 = vmatpush2.bf16.msra.mxu0 0
      %574 = vmatprep.mubr.bf16.mxu0 0
      %575 = vmatmul.mubr.bf16.gmra.mxu0 %v533
      %v576 = vpop.f32.mrf.mxu0
      %v577 = vadd.f32 0.0, %v576
      %v578 = vpop.f32.mrf.mxu0
      %v579 = vpop.f32.mrf.mxu0
      %v580 = vadd.f32 0.0, %v579
      %v581 = vpop.f32.mrf.mxu0
      %582 = vmatprep.mubr.bf16.mxu0 0
      %583 = vmatmul.mubr.bf16.gmra.mxu0 %v536
      %v584 = vpop.f32.mrf.mxu0
      %v585 = vadd.f32 0.0, %v584
      %v586 = vpop.f32.mrf.mxu0
      %v587 = vpop.f32.mrf.mxu0
      %v588 = vadd.f32 0.0, %v587
      %v589 = vpop.f32.mrf.mxu0
      %590 = vdwg.mxu0
      %v591 = vunpack.c.l.bf16 %v506
      %v592 = vunpack.c.l.bf16 %v507
      %v593 = vunpack.c.l.bf16 %v508
      %v594 = vunpack.c.l.bf16 %v509
      %v595 = vmul.f32 %v577, %v591
      %v596 = vmul.f32 %v580, %v592
      %v597 = vmul.f32 %v585, %v593
      %v598 = vmul.f32 %v588, %v594
      %v599 = vsel %vm393, %v505, 0.0
      %v600 = vrot.slane %v599, 4
      %v601 = vadd.f32 %v599, %v600
      %v602 = vrot.slane %v601, 2
      %v603 = vadd.f32 %v601, %v602
      %v604 = vrot.slane %v603, 1
      %v605 = vadd.f32 %v603, %v604
      %v606 = vpack.c.bf16 %v500, %v500
      %v607 = vpack.c.bf16 %v596, %v595
      %v608 = vpack.c.bf16 %v598, %v597
      %v610 = vsel %vm393, %v606, 0
      %612 = vmatprep.subr.bf16.mxu0 0
      %613 = vmatpush1.bf16.msra.mxu0 0
      %614 = vmatprep.subr.bf16.mxu0 0
      %615 = vmatpush1.bf16.msra.mxu0 0
      %616 = vmatprep.subr.bf16.mxu0 0
      %617 = vmatpush1.bf16.msra.mxu0 0
      %618 = vmatprep.subr.bf16.mxu0 0
      %619 = vmatpush1.bf16.msra.mxu0 0
      %620 = vmatprep.subr.bf16.mxu0 0
      %621 = vmatpush1.bf16.msra.mxu0 0
      %622 = vmatprep.subr.bf16.mxu0 0
      %623 = vmatpush1.bf16.msra.mxu0 0
      %624 = vmatprep.subr.bf16.mxu0 0
      %625 = vmatpush1.bf16.msra.mxu0 %v608
      %626 = vmatprep.subr.bf16.mxu0 0
      %627 = vmatpush1.bf16.msra.mxu0 %v607
      %628 = vmatprep.subr.bf16.mxu0 0
      %629 = vmatpush2.bf16.msra.mxu0 0
      %630 = vmatprep.subr.bf16.mxu0 0
      %631 = vmatpush2.bf16.msra.mxu0 0
      %632 = vmatprep.subr.bf16.mxu0 0
      %633 = vmatpush2.bf16.msra.mxu0 0
      %634 = vmatprep.subr.bf16.mxu0 0
      %635 = vmatpush2.bf16.msra.mxu0 0
      %636 = vmatprep.subr.bf16.mxu0 0
      %637 = vmatpush2.bf16.msra.mxu0 0
      %638 = vmatprep.subr.bf16.mxu0 0
      %639 = vmatpush2.bf16.msra.mxu0 0
      %640 = vmatprep.subr.bf16.mxu0 0
      %641 = vmatpush2.bf16.msra.mxu0 0
      %642 = vmatprep.subr.bf16.mxu0 0
      %643 = vmatpush2.bf16.msra.mxu0 0
      %644 = vmatprep.mubr.bf16.mxu0 0
      %645 = vmatmul.mubr.bf16.gmra.mxu0 %v610
      %v646 = vpop.f32.mrf.mxu0
      %v647 = vadd.f32 0.0, %v646
      %v648 = vpop.f32.mrf.mxu0
      %v649 = vpop.f32.mrf.mxu0
      %v650 = vpop.f32.mrf.mxu0
      %651 = vdwg.mxu0
      %v652 = vmul.f32 %v500, %v605
      %v653 = vpack.c.bf16 %v652, %v652
      %v658 = vunpack.c.l.b16 %v506
      %v659 = vunpack.c.l.b16 %v507
      %v660 = vunpack.c.l.b16 %v508
      %v661 = vunpack.c.l.b16 %v509
      %v662 = vpack.c.b16 %v659, %v658
      %v663 = vpack.c.b16 %v661, %v660
      %v667 = vsel %vm393, %v653, 0
      %669 = vmatprep.subr.bf16.mxu0 0
      %670 = vmatpush1.bf16.msra.mxu0 0
      %671 = vmatprep.subr.bf16.mxu0 0
      %672 = vmatpush1.bf16.msra.mxu0 0
      %673 = vmatprep.subr.bf16.mxu0 0
      %674 = vmatpush1.bf16.msra.mxu0 0
      %675 = vmatprep.subr.bf16.mxu0 0
      %676 = vmatpush1.bf16.msra.mxu0 0
      %677 = vmatprep.subr.bf16.mxu0 0
      %678 = vmatpush1.bf16.msra.mxu0 0
      %679 = vmatprep.subr.bf16.mxu0 0
      %680 = vmatpush1.bf16.msra.mxu0 0
      %681 = vmatprep.subr.bf16.mxu0 0
      %682 = vmatpush1.bf16.msra.mxu0 %v663
      %683 = vmatprep.subr.bf16.mxu0 0
      %684 = vmatpush1.bf16.msra.mxu0 %v662
      %685 = vmatprep.subr.bf16.mxu0 0
      %686 = vmatpush2.bf16.msra.mxu0 0
      %687 = vmatprep.subr.bf16.mxu0 0
      %688 = vmatpush2.bf16.msra.mxu0 0
      %689 = vmatprep.subr.bf16.mxu0 0
      %690 = vmatpush2.bf16.msra.mxu0 0
      %691 = vmatprep.subr.bf16.mxu0 0
      %692 = vmatpush2.bf16.msra.mxu0 0
      %693 = vmatprep.subr.bf16.mxu0 0
      %694 = vmatpush2.bf16.msra.mxu0 0
      %695 = vmatprep.subr.bf16.mxu0 0
      %696 = vmatpush2.bf16.msra.mxu0 0
      %697 = vmatprep.subr.bf16.mxu0 0
      %698 = vmatpush2.bf16.msra.mxu0 0
      %699 = vmatprep.subr.bf16.mxu0 0
      %700 = vmatpush2.bf16.msra.mxu0 0
      %701 = vmatprep.mubr.bf16.mxu0 0
      %702 = vmatmul.mubr.bf16.gmra.mxu0 %v667
      %v703 = vpop.f32.mrf.mxu0
      %v704 = vadd.f32 1e-06, %v703
      %v705 = vpop.f32.mrf.mxu0
      %v706 = vpop.f32.mrf.mxu0
      %v707 = vpop.f32.mrf.mxu0
      %708 = vdwg.mxu0
      %v709 = vrcp.pop %v704
      %v710 = vmul.f32 %v647, %v709
      %v711 = vld [vmem:[%s8] sm:$0x1]
      %v712 = vld [vmem:[%s8 + $0x1] sm:$0x1]
      %v713 = vld [vmem:[%s8 + $0x2] sm:$0x1]
      %v714 = vld [vmem:[%s8 + $0x3] sm:$0x1]
      %v715 = vpack.c.bf16 %v710, %v710
      %v716 = vld [vmem:[%s4] sm:$0xf]
      %v717 = vld [vmem:[%s4 + $0x4] sm:$0xf]
      %v718 = vld [vmem:[%s4 + $0x8] sm:$0xf]
      %v719 = vld [vmem:[%s4 + $0xc] sm:$0xf]
      %v724 = vunpack.c.l.b16 %v716
      %v725 = vunpack.c.l.b16 %v717
      %v726 = vunpack.c.l.b16 %v718
      %v727 = vunpack.c.l.b16 %v719
      %v728 = vpack.c.b16 %v725, %v724
      %v729 = vpack.c.b16 %v727, %v726
      %v733 = vsel %vm393, %v715, 0
      %735 = vmatprep.subr.bf16.mxu0 0
      %736 = vmatpush1.bf16.msra.mxu0 0
      %737 = vmatprep.subr.bf16.mxu0 0
      %738 = vmatpush1.bf16.msra.mxu0 0
      %739 = vmatprep.subr.bf16.mxu0 0
      %740 = vmatpush1.bf16.msra.mxu0 0
      %741 = vmatprep.subr.bf16.mxu0 0
      %742 = vmatpush1.bf16.msra.mxu0 0
      %743 = vmatprep.subr.bf16.mxu0 0
      %744 = vmatpush1.bf16.msra.mxu0 0
      %745 = vmatprep.subr.bf16.mxu0 0
      %746 = vmatpush1.bf16.msra.mxu0 0
      %747 = vmatprep.subr.bf16.mxu0 0
      %748 = vmatpush1.bf16.msra.mxu0 %v729
      %749 = vmatprep.subr.bf16.mxu0 0
      %750 = vmatpush1.bf16.msra.mxu0 %v728
      %751 = vmatprep.subr.bf16.mxu0 0
      %752 = vmatpush2.bf16.msra.mxu0 0
      %753 = vmatprep.subr.bf16.mxu0 0
      %754 = vmatpush2.bf16.msra.mxu0 0
      %755 = vmatprep.subr.bf16.mxu0 0
      %756 = vmatpush2.bf16.msra.mxu0 0
      %757 = vmatprep.subr.bf16.mxu0 0
      %758 = vmatpush2.bf16.msra.mxu0 0
      %759 = vmatprep.subr.bf16.mxu0 0
      %760 = vmatpush2.bf16.msra.mxu0 0
      %761 = vmatprep.subr.bf16.mxu0 0
      %762 = vmatpush2.bf16.msra.mxu0 0
      %763 = vmatprep.subr.bf16.mxu0 0
      %764 = vmatpush2.bf16.msra.mxu0 0
      %765 = vmatprep.subr.bf16.mxu0 0
      %766 = vmatpush2.bf16.msra.mxu0 0
      %767 = vmatprep.mubr.bf16.mxu0 0
      %768 = vmatmul.mubr.bf16.gmra.mxu0 %v733
      %v769 = vpop.f32.mrf.mxu0
      %v770 = vadd.f32 0.0, %v769
      %v771 = vpop.f32.mrf.mxu0
      %v772 = vpop.f32.mrf.mxu0
      %v773 = vpop.f32.mrf.mxu0
      %774 = vdwg.mxu0
      %v775 = vsel %vm393, %v770, 0.0
      %776 = vadd.xlane.f32.xlu0 %v775
      %v777 = vpop.xlane.xlu0 %776
      %v778 = vrcp.pop 32.0
      %v779 = vmul.f32 %v777, %v778
      %v780 = vsub.f32 %v770, %v779
      %v781 = vmul.f32 %v780, %v780
      %v782 = vsel %vm393, %v781, 0.0
      %783 = vadd.xlane.f32.xlu0 %v782
      %v784 = vpop.xlane.xlu0 %783
      %v785 = vmul.f32 %v784, %v778
      %v786 = vadd.f32 %v785, 1e-05
      %v787 = vrsqrt.pop %v786
      %v788 = vmul.f32 %v780, %v787
      %v789 = vlaneseq
      %v790 = vshrl.u32 %v789, 7
      %v791 = vsub.s32 0, %v790
      %v792 = vrot.slane %v711, %v791
      %v793 = vmul.f32 %v788, %v792
      %v794 = vlaneseq
      %v795 = vshrl.u32 %v794, 7
      %v796 = vsub.s32 0, %v795
      %v797 = vrot.slane %v712, %v796
      %v798 = vadd.f32 %v793, %v797
      %v799 = vld [vmem:[%s5] sm:$0xf]
      %v800 = vld [vmem:[%s5 + $0x4] sm:$0xf]
      %v801 = vld [vmem:[%s5 + $0x8] sm:$0xf]
      %v802 = vld [vmem:[%s5 + $0xc] sm:$0xf]
      %v803 = vpack.c.bf16 %v798, %v798
      %v804 = vld [vmem:[%s6] sm:$0xf]
      %v805 = vld [vmem:[%s6 + $0x4] sm:$0xf]
      %v806 = vld [vmem:[%s6 + $0x8] sm:$0xf]
      %v807 = vld [vmem:[%s6 + $0xc] sm:$0xf]
      %v812 = vunpack.c.l.b16 %v804
      %v813 = vunpack.c.l.b16 %v805
      %v814 = vunpack.c.l.b16 %v806
      %v815 = vunpack.c.l.b16 %v807
      %v816 = vpack.c.b16 %v813, %v812
      %v817 = vpack.c.b16 %v815, %v814
      %v821 = vsel %vm393, %v803, 0
      %823 = vmatprep.subr.bf16.mxu0 0
      %824 = vmatpush1.bf16.msra.mxu0 0
      %825 = vmatprep.subr.bf16.mxu0 0
      %826 = vmatpush1.bf16.msra.mxu0 0
      %827 = vmatprep.subr.bf16.mxu0 0
      %828 = vmatpush1.bf16.msra.mxu0 0
      %829 = vmatprep.subr.bf16.mxu0 0
      %830 = vmatpush1.bf16.msra.mxu0 0
      %831 = vmatprep.subr.bf16.mxu0 0
      %832 = vmatpush1.bf16.msra.mxu0 0
      %833 = vmatprep.subr.bf16.mxu0 0
      %834 = vmatpush1.bf16.msra.mxu0 0
      %835 = vmatprep.subr.bf16.mxu0 0
      %836 = vmatpush1.bf16.msra.mxu0 %v817
      %837 = vmatprep.subr.bf16.mxu0 0
      %838 = vmatpush1.bf16.msra.mxu0 %v816
      %839 = vmatprep.subr.bf16.mxu0 0
      %840 = vmatpush2.bf16.msra.mxu0 0
      %841 = vmatprep.subr.bf16.mxu0 0
      %842 = vmatpush2.bf16.msra.mxu0 0
      %843 = vmatprep.subr.bf16.mxu0 0
      %844 = vmatpush2.bf16.msra.mxu0 0
      %845 = vmatprep.subr.bf16.mxu0 0
      %846 = vmatpush2.bf16.msra.mxu0 0
      %847 = vmatprep.subr.bf16.mxu0 0
      %848 = vmatpush2.bf16.msra.mxu0 0
      %849 = vmatprep.subr.bf16.mxu0 0
      %850 = vmatpush2.bf16.msra.mxu0 0
      %851 = vmatprep.subr.bf16.mxu0 0
      %852 = vmatpush2.bf16.msra.mxu0 0
      %853 = vmatprep.subr.bf16.mxu0 0
      %854 = vmatpush2.bf16.msra.mxu0 0
      %855 = vmatprep.mubr.bf16.mxu0 0
      %856 = vmatmul.mubr.bf16.gmra.mxu0 %v821
      %v857 = vpop.f32.mrf.mxu0
      %v858 = vadd.f32 0.0, %v857
      %v859 = vpop.f32.mrf.mxu0
      %v860 = vpop.f32.mrf.mxu0
      %v861 = vpop.f32.mrf.mxu0
      %862 = vdwg.mxu0
      %v867 = vunpack.c.l.b16 %v799
      %v868 = vunpack.c.l.b16 %v800
      %v869 = vunpack.c.l.b16 %v801
      %v870 = vunpack.c.l.b16 %v802
      %v871 = vpack.c.b16 %v868, %v867
      %v872 = vpack.c.b16 %v870, %v869
      %875 = vmatprep.subr.bf16.mxu0 0
      %876 = vmatpush1.bf16.msra.mxu0 0
      %877 = vmatprep.subr.bf16.mxu0 0
      %878 = vmatpush1.bf16.msra.mxu0 0
      %879 = vmatprep.subr.bf16.mxu0 0
      %880 = vmatpush1.bf16.msra.mxu0 0
      %881 = vmatprep.subr.bf16.mxu0 0
      %882 = vmatpush1.bf16.msra.mxu0 0
      %883 = vmatprep.subr.bf16.mxu0 0
      %884 = vmatpush1.bf16.msra.mxu0 0
      %885 = vmatprep.subr.bf16.mxu0 0
      %886 = vmatpush1.bf16.msra.mxu0 0
      %887 = vmatprep.subr.bf16.mxu0 0
      %888 = vmatpush1.bf16.msra.mxu0 %v872
      %889 = vmatprep.subr.bf16.mxu0 0
      %890 = vmatpush1.bf16.msra.mxu0 %v871
      %891 = vmatprep.subr.bf16.mxu0 0
      %892 = vmatpush2.bf16.msra.mxu0 0
      %893 = vmatprep.subr.bf16.mxu0 0
      %894 = vmatpush2.bf16.msra.mxu0 0
      %895 = vmatprep.subr.bf16.mxu0 0
      %896 = vmatpush2.bf16.msra.mxu0 0
      %897 = vmatprep.subr.bf16.mxu0 0
      %898 = vmatpush2.bf16.msra.mxu0 0
      %899 = vmatprep.subr.bf16.mxu0 0
      %900 = vmatpush2.bf16.msra.mxu0 0
      %901 = vmatprep.subr.bf16.mxu0 0
      %902 = vmatpush2.bf16.msra.mxu0 0
      %903 = vmatprep.subr.bf16.mxu0 0
      %904 = vmatpush2.bf16.msra.mxu0 0
      %905 = vmatprep.subr.bf16.mxu0 0
      %906 = vmatpush2.bf16.msra.mxu0 0
      %907 = vmatprep.mubr.bf16.mxu0 0
      %908 = vmatmul.mubr.bf16.gmra.mxu0 %v395
      %v909 = vpop.f32.mrf.mxu0
      %v910 = vadd.f32 %v858, %v909
      %v911 = vpop.f32.mrf.mxu0
      %v912 = vpop.f32.mrf.mxu0
      %v913 = vpop.f32.mrf.mxu0
      %914 = vdwg.mxu0
      %v915 = vmax.f32 %v910, 0.0
      %v916 = vpack.c.bf16 %v915, %v915
      %v917 = vld [vmem:[%s7] sm:$0xf]
      %v918 = vld [vmem:[%s7 + $0x4] sm:$0xf]
      %v919 = vld [vmem:[%s7 + $0x8] sm:$0xf]
      %v920 = vld [vmem:[%s7 + $0xc] sm:$0xf]
      %v921 = vld [vmem:[%s7 + $0x10] sm:$0xf]
      %v922 = vld [vmem:[%s7 + $0x14] sm:$0xf]
      %v923 = vld [vmem:[%s7 + $0x18] sm:$0xf]
      %v924 = vld [vmem:[%s7 + $0x1c] sm:$0xf]
      %v933 = vunpack.c.l.b16 %v917
      %v934 = vunpack.c.l.b16 %v918
      %v935 = vunpack.c.l.b16 %v919
      %v936 = vunpack.c.l.b16 %v920
      %v937 = vunpack.c.l.b16 %v921
      %v938 = vunpack.c.l.b16 %v922
      %v939 = vunpack.c.l.b16 %v923
      %v940 = vunpack.c.l.b16 %v924
      %v941 = vpack.c.b16 %v934, %v933
      %v942 = vpack.c.b16 %v936, %v935
      %v943 = vpack.c.b16 %v938, %v937
      %v944 = vpack.c.b16 %v940, %v939
      %vm949 = vcmask 523264
      %v951 = vsel %vm949, %v916, 0
      %953 = vmatprep.subr.bf16.mxu0 0
      %954 = vmatpush1.bf16.msra.mxu0 0
      %955 = vmatprep.subr.bf16.mxu0 0
      %956 = vmatpush1.bf16.msra.mxu0 0
      %957 = vmatprep.subr.bf16.mxu0 0
      %958 = vmatpush1.bf16.msra.mxu0 0
      %959 = vmatprep.subr.bf16.mxu0 0
      %960 = vmatpush1.bf16.msra.mxu0 0
      %961 = vmatprep.subr.bf16.mxu0 0
      %962 = vmatpush1.bf16.msra.mxu0 %v944
      %963 = vmatprep.subr.bf16.mxu0 0
      %964 = vmatpush1.bf16.msra.mxu0 %v943
      %965 = vmatprep.subr.bf16.mxu0 0
      %966 = vmatpush1.bf16.msra.mxu0 %v942
      %967 = vmatprep.subr.bf16.mxu0 0
      %968 = vmatpush1.bf16.msra.mxu0 %v941
      %969 = vmatprep.subr.bf16.mxu0 0
      %970 = vmatpush2.bf16.msra.mxu0 0
      %971 = vmatprep.subr.bf16.mxu0 0
      %972 = vmatpush2.bf16.msra.mxu0 0
      %973 = vmatprep.subr.bf16.mxu0 0
      %974 = vmatpush2.bf16.msra.mxu0 0
      %975 = vmatprep.subr.bf16.mxu0 0
      %976 = vmatpush2.bf16.msra.mxu0 0
      %977 = vmatprep.subr.bf16.mxu0 0
      %978 = vmatpush2.bf16.msra.mxu0 0
      %979 = vmatprep.subr.bf16.mxu0 0
      %980 = vmatpush2.bf16.msra.mxu0 0
      %981 = vmatprep.subr.bf16.mxu0 0
      %982 = vmatpush2.bf16.msra.mxu0 0
      %983 = vmatprep.subr.bf16.mxu0 0
      %984 = vmatpush2.bf16.msra.mxu0 0
      %985 = vmatprep.mubr.bf16.mxu0 0
      %986 = vmatmul.mubr.bf16.gmra.mxu0 %v951
      %v987 = vpop.f32.mrf.mxu0
      %v988 = vadd.f32 0.0, %v987
      %v989 = vpop.f32.mrf.mxu0
      %v990 = vpop.f32.mrf.mxu0
      %v991 = vpop.f32.mrf.mxu0
      %992 = vdwg.mxu0
      %v993 = vsel %vm393, %v988, 0.0
      %994 = vadd.xlane.f32.xlu0 %v993
      %v995 = vpop.xlane.xlu0 %994
      %v996 = vmul.f32 %v995, %v778
      %v997 = vsub.f32 %v988, %v996
      %v998 = vmul.f32 %v997, %v997
      %v999 = vsel %vm393, %v998, 0.0
      %1000 = vadd.xlane.f32.xlu0 %v999
      %v1001 = vpop.xlane.xlu0 %1000
      %v1002 = vmul.f32 %v1001, %v778
      %v1003 = vadd.f32 %v1002, 1e-05
      %v1004 = vrsqrt.pop %v1003
      %v1005 = vmul.f32 %v997, %v1004
      %v1006 = vlaneseq
      %v1007 = vshrl.u32 %v1006, 7
      %v1008 = vsub.s32 0, %v1007
      %v1009 = vrot.slane %v713, %v1008
      %v1010 = vmul.f32 %v1005, %v1009
      %v1011 = vlaneseq
      %v1012 = vshrl.u32 %v1011, 7
      %v1013 = vsub.s32 0, %v1012
      %v1014 = vrot.slane %v714, %v1013
      %v1015 = vadd.f32 %v1010, %v1014
      %v1016 = vadd.f32 %v373, %v1015
      %1017 = vst.msk [vmem:[%s371] sm:$0xff] %vm393, %v1016
      %p1018 = scmp.lt.s32.totalorder %s21, 1
      %s1019 = scalar_select %p1018, %s21, 1
      %s1020 = smul.addr %s1019, 8
      %s1021 = scalar_lea.vmem %s10, %s1020
      // Predicated region
      $region61: #{feature_transformer.5} parent=59 // pred_check
        %p1022 = pneg %p259
      $region62: #{feature_transformer.5} parent=59 // pred_check_branch
        %1024 = sbr.rel (%p1022) target = $region64
      $region63: #{feature_transformer.5} parent=59 // pred_region
        _
      $region64: #{feature_transformer.5} parent=59 // pred_fallthru
        _
    $region60: #{feature_transformer.5} parent=5 // pred_fallthru
      _
    %p1025 = scmp.le.s32.totalorder 2, %s16
    // Predicated region
    $region65: #{feature_transformer.5} parent=5 // pred_check
      %p1026 = pneg %p1025
    $region66: #{feature_transformer.5} parent=5 // pred_check_branch
      %1028 = sbr.rel (%p1026) target = $region68
    $region67: #{feature_transformer.5} parent=5 // pred_region
      %s1029 = ssub.s32 %s16, 2
      // Predicated region
      $region69: #{feature_transformer.5} parent=67 // pred_check
        %p1030 = pneg %p265
      $region70: #{feature_transformer.5} parent=67 // pred_check_branch
        %1032 = sbr.rel (%p1030) target = $region72
      $region71: #{feature_transformer.5} parent=67 // pred_region
        %p1033 = scmp.lt.s32.totalorder %s22, 1
        %s1034 = scalar_select %p1033, %s22, 1
        %s1035 = smul.addr %s1034, 8
        %s1036 = scalar_lea.vmem %s10, %s1035
      $region72: #{feature_transformer.5} parent=67 // pred_fallthru
        _
    $region68: #{feature_transformer.5} parent=5 // pred_fallthru
      _
  $region6: #{feature_transformer.5} parent=0 // loop_footer
    %s20 = sadd.s32 1, %s16
  $region7: #{feature_transformer.5} parent=0 // loop_footer_branch
    %15 = sbr.rel target = $region3
  $region8: #{feature_transformer.5} parent=0 // loop_exit
    _

// kernel: feature_transformer.7
$region0: #{feature_transformer.7}
  #allocation0 [shape = 'u32[]', space=smem, size = 0x4, offset = 0x4, fixed_abs, tag = 'smem constant byte address 0x4 - core index']
  #allocation1 [shape = 'u32[144,128]{1,0:T(1,128)}', space=vmem, size = 0x12000, scoped, tag = 'internal scratch']
  %s0 = inlined_call_operand.vmem [shape: f32[2,8,32], index: 0, kind: input, shape index: {}]
  %s1 = inlined_call_operand.vmem [shape: f32[2,8,32], index: 1, kind: input, shape index: {}]
  %s2 = inlined_call_operand.vmem [shape: bf16[32,32], index: 2, kind: input, shape index: {}]
  %s3 = inlined_call_operand.vmem [shape: bf16[32,64], index: 3, kind: input, shape index: {}]
  %s4 = inlined_call_operand.vmem [shape: bf16[32,32], index: 4, kind: input, shape index: {}]
  %s5 = inlined_call_operand.vmem [shape: bf16[32,64], index: 5, kind: input, shape index: {}]
  %s6 = inlined_call_operand.vmem [shape: bf16[32,64], index: 6, kind: input, shape index: {}]
  %s7 = inlined_call_operand.vmem [shape: bf16[64,32], index: 7, kind: input, shape index: {}]
  %s8 = inlined_call_operand.vmem [shape: f32[4,32], index: 8, kind: input, shape index: {}]
  %s9 = inlined_call_operand.vmem [shape: bf16[32,32], index: 9, kind: input, shape index: {}]
  %s10 = inlined_call_operand.hbm [shape: f32[2,8,32], index: 10, kind: output, shape index: {}]
  %s11 = sld [smem:[#allocation0]]
  $region73: #{feature_transformer.7} parent=0
    _
  %s13 = ssub.s32 1, %s11
  %s14 = scalar_select 0, %s13, %s11
  $region1: #{feature_transformer.7} parent=0
    #allocation2 [shape = 'u8[8192]{0}', space=vmem, size = 0x2000, scoped, tag = 'output window, operand 0']
    #allocation3 [shape = 's32[2]{0}', space=sflag, size = 0x8, scoped, tag = 'scoped memory for feature_transformer.7']
    %15 = vsyncpa [#allocation3], 0
    %s16 = scalar_lea.sflag [#allocation3], 1
    %17 = vsyncpa %s16, 0
    loop: start=0, step=1, limit=4
    $region2: #{feature_transformer.7} parent=1 // loop_pre_header
      _
    $region3: #{feature_transformer.7} parent=1 // loop_header
      %s19 = sphi 0, %s23
      %p20 = scmp.ge.s32.totalorder %s19, 4
      %s29 = sphi 0, %s31
      %s32 = sphi 0, %s29
      %s33 = sphi 0, %s32
      %s49 = sphi 0, %s33
      %s55 = sphi 0, %s57
      %s58 = sphi 0, %s55
      %s59 = sphi 0, %s58
      %s75 = sphi 0, %s59
      %s79 = sphi 0, %s79
      %s81 = sphi 0, %s79
      %s82 = sphi 0, %s81
      %s96 = sphi 0, %s82
      %s100 = sphi 0, %s100
      %s102 = sphi 0, %s100
      %s103 = sphi 0, %s102
      %s117 = sphi 0, %s103
      %s121 = sphi 0, %s121
      %s123 = sphi 0, %s121
      %s124 = sphi 0, %s123
      %s138 = sphi 0, %s124
      %s142 = sphi 0, %s142
      %s144 = sphi 0, %s142
      %s145 = sphi 0, %s144
      %s159 = sphi 0, %s145
      %s163 = sphi 0, %s163
      %s165 = sphi 0, %s163
      %s166 = sphi 0, %s165
      %s180 = sphi 0, %s166
      %s184 = sphi 0, %s184
      %s186 = sphi 0, %s184
      %s187 = sphi 0, %s186
      %s201 = sphi 0, %s187
      %s205 = sphi 0, %s205
      %s207 = sphi 0, %s205
      %s208 = sphi 0, %s207
      %s222 = sphi 0, %s208
      %s226 = sphi 0, %s226
      %s228 = sphi 0, %s226
      %s229 = sphi 0, %s228
      %s243 = sphi 0, %s229
      %s249 = sphi 0, %s251
      %s252 = sphi 0, %s249
      %s253 = sphi 0, %s252
      %s269 = sphi 0, %s253
    $region4: #{feature_transformer.7} parent=1 // loop_header_branch
      %22 = sbr.rel (%p20) target = $region8
    $region5: #{feature_transformer.7} parent=1 // loop_body
      %s24 = ssub.s32 %s19, 1
      %s25 = ssub.s32 %s19, 2
      %s26 = sadd.s32 %s19, 1
      %s27 = ssub.s32 %s19, %s26
      %p28 = scmp.eq.s32.totalorder %s27, 0
      %s30 = sadd.s32 %s29, 1
      %s31 = scalar_select %p28, %s29, %s30
      %p34 = pneg %p28
      %p35 = scmp.eq.s32.totalorder %s19, 1
      %p36 = por %p34, %p35
      %p37 = scmp.ne.s32.totalorder %s29, %s32
      %p38 = scmp.eq.s32.totalorder %s19, 0
      %p39 = por %p37, %p38
      %p40 = scmp.ne.s32.totalorder %s29, %s32
      %p41 = scmp.eq.s32.totalorder %s24, 1
      %p42 = por %p40, %p41
      %p43 = scmp.ne.s32.totalorder %s32, %s33
      %p44 = scmp.eq.s32.totalorder %s24, 0
      %p45 = por %p43, %p44
      %p46 = scmp.ne.s32.totalorder %s32, %s33
      %p47 = scmp.eq.s32.totalorder %s25, 1
      %p48 = por %p46, %p47
      %p50 = scmp.ne.s32.totalorder %s33, %s49
      %p51 = scmp.eq.s32.totalorder %s25, 0
      %p52 = por %p50, %p51
      %s53 = ssub.s32 %s19, %s26
      %p54 = scmp.eq.s32.totalorder %s53, 0
      %s56 = sadd.s32 %s55, 1
      %s57 = scalar_select %p54, %s55, %s56
      %p60 = pneg %p54
      %p61 = scmp.eq.s32.totalorder %s19, 1
      %p62 = por %p60, %p61
      %p63 = scmp.ne.s32.totalorder %s55, %s58
      %p64 = scmp.eq.s32.totalorder %s19, 0
      %p65 = por %p63, %p64
      %p66 = scmp.ne.s32.totalorder %s55, %s58
      %p67 = scmp.eq.s32.totalorder %s24, 1
      %p68 = por %p66, %p67
      %p69 = scmp.ne.s32.totalorder %s58, %s59
      %p70 = scmp.eq.s32.totalorder %s24, 0
      %p71 = por %p69, %p70
      %p72 = scmp.ne.s32.totalorder %s58, %s59
      %p73 = scmp.eq.s32.totalorder %s25, 1
      %p74 = por %p72, %p73
      %p76 = scmp.ne.s32.totalorder %s59, %s75
      %p77 = scmp.eq.s32.totalorder %s25, 0
      %p78 = por %p76, %p77
      %s80 = sadd.s32 %s79, 1
      %p83 = scmp.eq.s32.totalorder %s19, 1
      %p84 = scmp.ne.s32.totalorder %s79, %s81
      %p85 = scmp.eq.s32.totalorder %s19, 0
      %p86 = por %p84, %p85
      %p87 = scmp.ne.s32.totalorder %s79, %s81
      %p88 = scmp.eq.s32.totalorder %s24, 1
      %p89 = por %p87, %p88
      %p90 = scmp.ne.s32.totalorder %s81, %s82
      %p91 = scmp.eq.s32.totalorder %s24, 0
      %p92 = por %p90, %p91
      %p93 = scmp.ne.s32.totalorder %s81, %s82
      %p94 = scmp.eq.s32.totalorder %s25, 1
      %p95 = por %p93, %p94
      %p97 = scmp.ne.s32.totalorder %s82, %s96
      %p98 = scmp.eq.s32.totalorder %s25, 0
      %p99 = por %p97, %p98
      %s101 = sadd.s32 %s100, 1
      %p104 = scmp.eq.s32.totalorder %s19, 1
      %p105 = scmp.ne.s32.totalorder %s100, %s102
      %p106 = scmp.eq.s32.totalorder %s19, 0
      %p107 = por %p105, %p106
      %p108 = scmp.ne.s32.totalorder %s100, %s102
      %p109 = scmp.eq.s32.totalorder %s24, 1
      %p110 = por %p108, %p109
      %p111 = scmp.ne.s32.totalorder %s102, %s103
      %p112 = scmp.eq.s32.totalorder %s24, 0
      %p113 = por %p111, %p112
      %p114 = scmp.ne.s32.totalorder %s102, %s103
      %p115 = scmp.eq.s32.totalorder %s25, 1
      %p116 = por %p114, %p115
      %p118 = scmp.ne.s32.totalorder %s103, %s117
      %p119 = scmp.eq.s32.totalorder %s25, 0
      %p120 = por %p118, %p119
      %s122 = sadd.s32 %s121, 1
      %p125 = scmp.eq.s32.totalorder %s19, 1
      %p126 = scmp.ne.s32.totalorder %s121, %s123
      %p127 = scmp.eq.s32.totalorder %s19, 0
      %p128 = por %p126, %p127
      %p129 = scmp.ne.s32.totalorder %s121, %s123
      %p130 = scmp.eq.s32.totalorder %s24, 1
      %p131 = por %p129, %p130
      %p132 = scmp.ne.s32.totalorder %s123, %s124
      %p133 = scmp.eq.s32.totalorder %s24, 0
      %p134 = por %p132, %p133
      %p135 = scmp.ne.s32.totalorder %s123, %s124
      %p136 = scmp.eq.s32.totalorder %s25, 1
      %p137 = por %p135, %p136
      %p139 = scmp.ne.s32.totalorder %s124, %s138
      %p140 = scmp.eq.s32.totalorder %s25, 0
      %p141 = por %p139, %p140
      %s143 = sadd.s32 %s142, 1
      %p146 = scmp.eq.s32.totalorder %s19, 1
      %p147 = scmp.ne.s32.totalorder %s142, %s144
      %p148 = scmp.eq.s32.totalorder %s19, 0
      %p149 = por %p147, %p148
      %p150 = scmp.ne.s32.totalorder %s142, %s144
      %p151 = scmp.eq.s32.totalorder %s24, 1
      %p152 = por %p150, %p151
      %p153 = scmp.ne.s32.totalorder %s144, %s145
      %p154 = scmp.eq.s32.totalorder %s24, 0
      %p155 = por %p153, %p154
      %p156 = scmp.ne.s32.totalorder %s144, %s145
      %p157 = scmp.eq.s32.totalorder %s25, 1
      %p158 = por %p156, %p157
      %p160 = scmp.ne.s32.totalorder %s145, %s159
      %p161 = scmp.eq.s32.totalorder %s25, 0
      %p162 = por %p160, %p161
      %s164 = sadd.s32 %s163, 1
      %p167 = scmp.eq.s32.totalorder %s19, 1
      %p168 = scmp.ne.s32.totalorder %s163, %s165
      %p169 = scmp.eq.s32.totalorder %s19, 0
      %p170 = por %p168, %p169
      %p171 = scmp.ne.s32.totalorder %s163, %s165
      %p172 = scmp.eq.s32.totalorder %s24, 1
      %p173 = por %p171, %p172
      %p174 = scmp.ne.s32.totalorder %s165, %s166
      %p175 = scmp.eq.s32.totalorder %s24, 0
      %p176 = por %p174, %p175
      %p177 = scmp.ne.s32.totalorder %s165, %s166
      %p178 = scmp.eq.s32.totalorder %s25, 1
      %p179 = por %p177, %p178
      %p181 = scmp.ne.s32.totalorder %s166, %s180
      %p182 = scmp.eq.s32.totalorder %s25, 0
      %p183 = por %p181, %p182
      %s185 = sadd.s32 %s184, 1
      %p188 = scmp.eq.s32.totalorder %s19, 1
      %p189 = scmp.ne.s32.totalorder %s184, %s186
      %p190 = scmp.eq.s32.totalorder %s19, 0
      %p191 = por %p189, %p190
      %p192 = scmp.ne.s32.totalorder %s184, %s186
      %p193 = scmp.eq.s32.totalorder %s24, 1
      %p194 = por %p192, %p193
      %p195 = scmp.ne.s32.totalorder %s186, %s187
      %p196 = scmp.eq.s32.totalorder %s24, 0
      %p197 = por %p195, %p196
      %p198 = scmp.ne.s32.totalorder %s186, %s187
      %p199 = scmp.eq.s32.totalorder %s25, 1
      %p200 = por %p198, %p199
      %p202 = scmp.ne.s32.totalorder %s187, %s201
      %p203 = scmp.eq.s32.totalorder %s25, 0
      %p204 = por %p202, %p203
      %s206 = sadd.s32 %s205, 1
      %p209 = scmp.eq.s32.totalorder %s19, 1
      %p210 = scmp.ne.s32.totalorder %s205, %s207
      %p211 = scmp.eq.s32.totalorder %s19, 0
      %p212 = por %p210, %p211
      %p213 = scmp.ne.s32.totalorder %s205, %s207
      %p214 = scmp.eq.s32.totalorder %s24, 1
      %p215 = por %p213, %p214
      %p216 = scmp.ne.s32.totalorder %s207, %s208
      %p217 = scmp.eq.s32.totalorder %s24, 0
      %p218 = por %p216, %p217
      %p219 = scmp.ne.s32.totalorder %s207, %s208
      %p220 = scmp.eq.s32.totalorder %s25, 1
      %p221 = por %p219, %p220
      %p223 = scmp.ne.s32.totalorder %s208, %s222
      %p224 = scmp.eq.s32.totalorder %s25, 0
      %p225 = por %p223, %p224
      %s227 = sadd.s32 %s226, 1
      %p230 = scmp.eq.s32.totalorder %s19, 1
      %p231 = scmp.ne.s32.totalorder %s226, %s228
      %p232 = scmp.eq.s32.totalorder %s19, 0
      %p233 = por %p231, %p232
      %p234 = scmp.ne.s32.totalorder %s226, %s228
      %p235 = scmp.eq.s32.totalorder %s24, 1
      %p236 = por %p234, %p235
      %p237 = scmp.ne.s32.totalorder %s228, %s229
      %p238 = scmp.eq.s32.totalorder %s24, 0
      %p239 = por %p237, %p238
      %p240 = scmp.ne.s32.totalorder %s228, %s229
      %p241 = scmp.eq.s32.totalorder %s25, 1
      %p242 = por %p240, %p241
      %p244 = scmp.ne.s32.totalorder %s229, %s243
      %p245 = scmp.eq.s32.totalorder %s25, 0
      %p246 = por %p244, %p245
      %s247 = ssub.s32 %s19, %s26
      %p248 = scmp.eq.s32.totalorder %s247, 0
      %s250 = sadd.s32 %s249, 1
      %s251 = scalar_select %p248, %s249, %s250
      %p254 = pneg %p248
      %p255 = scmp.eq.s32.totalorder %s19, 1
      %p256 = por %p254, %p255
      %p257 = scmp.ne.s32.totalorder %s249, %s252
      %p258 = scmp.eq.s32.totalorder %s19, 0
      %p259 = por %p257, %p258
      %p260 = scmp.ne.s32.totalorder %s249, %s252
      %p261 = scmp.eq.s32.totalorder %s24, 1
      %p262 = por %p260, %p261
      %p263 = scmp.ne.s32.totalorder %s252, %s253
      %p264 = scmp.eq.s32.totalorder %s24, 0
      %p265 = por %p263, %p264
      %p266 = scmp.ne.s32.totalorder %s252, %s253
      %p267 = scmp.eq.s32.totalorder %s25, 1
      %p268 = por %p266, %p267
      %p270 = scmp.ne.s32.totalorder %s253, %s269
      %p271 = scmp.eq.s32.totalorder %s25, 0
      %p272 = por %p270, %p271
      %p273 = scmp.le.s32.totalorder 1, %s19
      %p274 = scmp.lt.s32.totalorder %s19, 3
      %p275 = pnand %p273, %p274
      %p276 = pneg %p275
      // Predicated region
      $region9: #{feature_transformer.7} parent=5 // pred_check
        _
      $region10: #{feature_transformer.7} parent=5 // pred_check_branch
        %278 = sbr.rel (%p275) target = $region12
      $region11: #{feature_transformer.7} parent=5 // pred_region
        %s279 = ssub.s32 %s19, 1
        // Predicated region
        $region13: #{feature_transformer.7} parent=11 // pred_check
          %p280 = pneg %p92
        $region14: #{feature_transformer.7} parent=11 // pred_check_branch
          %282 = sbr.rel (%p280) target = $region16
        $region15: #{feature_transformer.7} parent=11 // pred_region
          _
        $region16: #{feature_transformer.7} parent=11 // pred_fallthru
          _
        // Predicated region
        $region17: #{feature_transformer.7} parent=11 // pred_check
          %p283 = pneg %p113
        $region18: #{feature_transformer.7} parent=11 // pred_check_branch
          %285 = sbr.rel (%p283) target = $region20
        $region19: #{feature_transformer.7} parent=11 // pred_region
          _
        $region20: #{feature_transformer.7} parent=11 // pred_fallthru
          _
        // Predicated region
        $region21: #{feature_transformer.7} parent=11 // pred_check
          %p286 = pneg %p134
        $region22: #{feature_transformer.7} parent=11 // pred_check_branch
          %288 = sbr.rel (%p286) target = $region24
        $region23: #{feature_transformer.7} parent=11 // pred_region
          _
        $region24: #{feature_transformer.7} parent=11 // pred_fallthru
          _
        // Predicated region
        $region25: #{feature_transformer.7} parent=11 // pred_check
          %p289 = pneg %p155
        $region26: #{feature_transformer.7} parent=11 // pred_check_branch
          %291 = sbr.rel (%p289) target = $region28
        $region27: #{feature_transformer.7} parent=11 // pred_region
          _
        $region28: #{feature_transformer.7} parent=11 // pred_fallthru
          _
        // Predicated region
        $region29: #{feature_transformer.7} parent=11 // pred_check
          %p292 = pneg %p176
        $region30: #{feature_transformer.7} parent=11 // pred_check_branch
          %294 = sbr.rel (%p292) target = $region32
        $region31: #{feature_transformer.7} parent=11 // pred_region
          _
        $region32: #{feature_transformer.7} parent=11 // pred_fallthru
          _
        // Predicated region
        $region33: #{feature_transformer.7} parent=11 // pred_check
          %p295 = pneg %p197
        $region34: #{feature_transformer.7} parent=11 // pred_check_branch
          %297 = sbr.rel (%p295) target = $region36
        $region35: #{feature_transformer.7} parent=11 // pred_region
          _
        $region36: #{feature_transformer.7} parent=11 // pred_fallthru
          _
        // Predicated region
        $region37: #{feature_transformer.7} parent=11 // pred_check
          %p298 = pneg %p218
        $region38: #{feature_transformer.7} parent=11 // pred_check_branch
          %300 = sbr.rel (%p298) target = $region40
        $region39: #{feature_transformer.7} parent=11 // pred_region
          _
        $region40: #{feature_transformer.7} parent=11 // pred_fallthru
          _
        // Predicated region
        $region41: #{feature_transformer.7} parent=11 // pred_check
          %p301 = pneg %p239
        $region42: #{feature_transformer.7} parent=11 // pred_check_branch
          %303 = sbr.rel (%p301) target = $region44
        $region43: #{feature_transformer.7} parent=11 // pred_region
          _
        $region44: #{feature_transformer.7} parent=11 // pred_fallthru
          _
      $region12: #{feature_transformer.7} parent=5 // pred_fallthru
        _
      %p304 = scmp.lt.s32.totalorder %s19, 2
      // Predicated region
      $region45: #{feature_transformer.7} parent=5 // pred_check
        %p305 = pneg %p304
      $region46: #{feature_transformer.7} parent=5 // pred_check_branch
        %307 = sbr.rel (%p305) target = $region48
      $region47: #{feature_transformer.7} parent=5 // pred_region
        // Predicated region
        $region49: #{feature_transformer.7} parent=47 // pred_check
          %p308 = pneg %p39
        $region50: #{feature_transformer.7} parent=47 // pred_check_branch
          %310 = sbr.rel (%p308) target = $region52
        $region51: #{feature_transformer.7} parent=47 // pred_region
          %p311 = scmp.lt.s32.totalorder %s19, 1
          %s312 = scalar_select %p311, %s19, 1
          %s313 = smul.addr %s312, 8
          %s314 = scalar_lea.vmem %s0, %s313
        $region52: #{feature_transformer.7} parent=47 // pred_fallthru
          _
        // Predicated region
        $region53: #{feature_transformer.7} parent=47 // pred_check
          %p315 = pneg %p65
        $region54: #{feature_transformer.7} parent=47 // pred_check_branch
          %317 = sbr.rel (%p315) target = $region56
        $region55: #{feature_transformer.7} parent=47 // pred_region
          %p318 = scmp.lt.s32.totalorder %s19, 1
          %s319 = scalar_select %p318, %s19, 1
          %s320 = smul.addr %s319, 8
          %s321 = scalar_lea.vmem %s1, %s320
        $region56: #{feature_transformer.7} parent=47 // pred_fallthru
          _
      $region48: #{feature_transformer.7} parent=5 // pred_fallthru
        _
      %p322 = scmp.le.s32.totalorder 1, %s19
      %p323 = scmp.lt.s32.totalorder %s19, 3
      %p324 = pnand %p322, %p323
      %p325 = pneg %p324
      // Predicated region
      $region57: #{feature_transformer.7} parent=5 // pred_check
        _
      $region58: #{feature_transformer.7} parent=5 // pred_check_branch
        %327 = sbr.rel (%p324) target = $region60
      $region59: #{feature_transformer.7} parent=5 // pred_region
        %s328 = ssub.s32 %s19, 1
        %p329 = scmp.lt.s32.totalorder %s24, 1
        %s330 = scalar_select %p329, %s24, 1
        %s331 = smul.addr %s330, 8
        %s332 = scalar_lea.vmem %s0, %s331
        %p333 = pneg %p45
        %p334 = pneg %p42
        %p335 = scmp.lt.s32.totalorder %s24, 1
        %s336 = scalar_select %p335, %s24, 1
        %s337 = smul.addr %s336, 8
        %s338 = scalar_lea.vmem %s1, %s337
        %p339 = pneg %p71
        %p340 = pneg %p68
        %p341 = pneg %p92
        %p342 = pneg %p89
        %p343 = pneg %p113
        %p344 = pneg %p110
        %p345 = pneg %p134
        %p346 = pneg %p131
        %p347 = pneg %p155
        %p348 = pneg %p152
        %p349 = pneg %p176
        %p350 = pneg %p173
        %p351 = pneg %p197
        %p352 = pneg %p194
        %p353 = pneg %p218
        %p354 = pneg %p215
        %p355 = pneg %p239
        %p356 = pneg %p236
        %p357 = pneg %p265
        %p358 = pneg %p262
        %s359 = sand.u32 %s252, 1
        %s360 = scalar_lea.sflag [#allocation3], %s359
        %s361 = sand.u32 %s252, 1
        %s362 = smul.addr %s361, 8
        %s363 = scalar_lea.vmem [#allocation2], %s362
        %p364 = scmp.lt.s32.totalorder %s24, 1
        %s365 = scalar_select %p364, %s24, 1
        %s366 = smul.addr %s365, 8
        %s367 = scalar_lea.vmem %s0, %s366
        %p368 = scmp.lt.s32.totalorder %s24, 1
        %s369 = scalar_select %p368, %s24, 1
        %s370 = smul.addr %s369, 8
        %s371 = scalar_lea.vmem %s1, %s370
        %v373 = vld [vmem:[%s367] sm:$0xff]
        %v374 = vld [vmem:[%s371] sm:$0xff]
        %v375 = vpack.c.bf16 %v373, %v373
        %v376 = vpack.c.bf16 %v374, %v374
        %v377 = vld [vmem:[%s2] sm:$0xf]
        %v378 = vld [vmem:[%s2 + $0x4] sm:$0xf]
        %v379 = vld [vmem:[%s2 + $0x8] sm:$0xf]
        %v380 = vld [vmem:[%s2 + $0xc] sm:$0xf]
        %v385 = vunpack.c.l.b16 %v377
        %v386 = vunpack.c.l.b16 %v378
        %v387 = vunpack.c.l.b16 %v379
        %v388 = vunpack.c.l.b16 %v380
        %v389 = vpack.c.b16 %v386, %v385
        %v390 = vpack.c.b16 %v388, %v387
        %vm393 = vcmask 261120
        %v395 = vsel %vm393, %v375, 0
        %397 = vmatprep.subr.bf16.mxu0 0
        %398 = vmatpush1.bf16.msra.mxu0 0
        %399 = vmatprep.subr.bf16.mxu0 0
        %400 = vmatpush1.bf16.msra.mxu0 0
        %401 = vmatprep.subr.bf16.mxu0 0
        %402 = vmatpush1.bf16.msra.mxu0 0
        %403 = vmatprep.subr.bf16.mxu0 0
        %404 = vmatpush1.bf16.msra.mxu0 0
        %405 = vmatprep.subr.bf16.mxu0 0
        %406 = vmatpush1.bf16.msra.mxu0 0
        %407 = vmatprep.subr.bf16.mxu0 0
        %408 = vmatpush1.bf16.msra.mxu0 0
        %409 = vmatprep.subr.bf16.mxu0 0
        %410 = vmatpush1.bf16.msra.mxu0 %v390
        %411 = vmatprep.subr.bf16.mxu0 0
        %412 = vmatpush1.bf16.msra.mxu0 %v389
        %413 = vmatprep.subr.bf16.mxu0 0
        %414 = vmatpush2.bf16.msra.mxu0 0
        %415 = vmatprep.subr.bf16.mxu0 0
        %416 = vmatpush2.bf16.msra.mxu0 0
        %417 = vmatprep.subr.bf16.mxu0 0
        %418 = vmatpush2.bf16.msra.mxu0 0
        %419 = vmatprep.subr.bf16.mxu0 0
        %420 = vmatpush2.bf16.msra.mxu0 0
        %421 = vmatprep.subr.bf16.mxu0 0
        %422 = vmatpush2.bf16.msra.mxu0 0
        %423 = vmatprep.subr.bf16.mxu0 0
        %424 = vmatpush2.bf16.msra.mxu0 0
        %425 = vmatprep.subr.bf16.mxu0 0
        %426 = vmatpush2.bf16.msra.mxu0 0
        %427 = vmatprep.subr.bf16.mxu0 0
        %428 = vmatpush2.bf16.msra.mxu0 0
        %429 = vmatprep.mubr.bf16.mxu0 0
        %430 = vmatmul.mubr.bf16.gmra.mxu0 %v395
        %v431 = vpop.f32.mrf.mxu0
        %v432 = vadd.f32 0.0, %v431
        %v433 = vpop.f32.mrf.mxu0
        %v434 = vpop.f32.mrf.mxu0
        %v435 = vpop.f32.mrf.mxu0
        %436 = vdwg.mxu0
        %v437 = vld [vmem:[%s3] sm:$0xf]
        %v438 = vld [vmem:[%s3 + $0x4] sm:$0xf]
        %v439 = vld [vmem:[%s3 + $0x8] sm:$0xf]
        %v440 = vld [vmem:[%s3 + $0xc] sm:$0xf]
        %v445 = vunpack.c.l.b16 %v437
        %v446 = vunpack.c.l.b16 %v438
        %v447 = vunpack.c.l.b16 %v439
        %v448 = vunpack.c.l.b16 %v440
        %v449 = vpack.c.b16 %v446, %v445
        %v450 = vpack.c.b16 %v448, %v447
        %v454 = vsel %vm393, %v376, 0
        %456 = vmatprep.subr.bf16.mxu0 0
        %457 = vmatpush1.bf16.msra.mxu0 0
        %458 = vmatprep.subr.bf16.mxu0 0
        %459 = vmatpush1.bf16.msra.mxu0 0
        %460 = vmatprep.subr.bf16.mxu0 0
        %461 = vmatpush1.bf16.msra.mxu0 0
        %462 = vmatprep.subr.bf16.mxu0 0
        %463 = vmatpush1.bf16.msra.mxu0 0
        %464 = vmatprep.subr.bf16.mxu0 0
        %465 = vmatpush1.bf16.msra.mxu0 0
        %466 = vmatprep.subr.bf16.mxu0 0
        %467 = vmatpush1.bf16.msra.mxu0 0
        %468 = vmatprep.subr.bf16.mxu0 0
        %469 = vmatpush1.bf16.msra.mxu0 %v450
        %470 = vmatprep.subr.bf16.mxu0 0
        %471 = vmatpush1.bf16.msra.mxu0 %v449
        %472 = vmatprep.subr.bf16.mxu0 0
        %473 = vmatpush2.bf16.msra.mxu0 0
        %474 = vmatprep.subr.bf16.mxu0 0
        %475 = vmatpush2.bf16.msra.mxu0 0
        %476 = vmatprep.subr.bf16.mxu0 0
        %477 = vmatpush2.bf16.msra.mxu0 0
        %478 = vmatprep.subr.bf16.mxu0 0
        %479 = vmatpush2.bf16.msra.mxu0 0
        %480 = vmatprep.subr.bf16.mxu0 0
        %481 = vmatpush2.bf16.msra.mxu0 0
        %482 = vmatprep.subr.bf16.mxu0 0
        %483 = vmatpush2.bf16.msra.mxu0 0
        %484 = vmatprep.subr.bf16.mxu0 0
        %485 = vmatpush2.bf16.msra.mxu0 0
        %486 = vmatprep.subr.bf16.mxu0 0
        %487 = vmatpush2.bf16.msra.mxu0 0
        %488 = vmatprep.mubr.bf16.mxu0 0
        %489 = vmatmul.mubr.bf16.gmra.mxu0 %v454
        %v490 = vpop.f32.mrf.mxu0
        %v491 = vadd.f32 0.0, %v490
        %v492 = vpop.f32.mrf.mxu0
        %v493 = vpop.f32.mrf.mxu0
        %v494 = vpop.f32.mrf.mxu0
        %495 = vdwg.mxu0
        %vm496 = vcmp.gt.f32.partialorder %v432, 0.0
        %v497 = vadd.f32 %v432, 1.0
        %v498 = vmul.f32 %v432, 1.442695
        %v499 = vpow.pop %v498
        %v500 = vsel %vm496, %v497, %v499
        %vm501 = vcmp.gt.f32.partialorder %v491, 0.0
        %v502 = vadd.f32 %v491, 1.0
        %v503 = vmul.f32 %v491, 1.442695
        %v504 = vpow.pop %v503
        %v505 = vsel %vm501, %v502, %v504
        %v506 = vld [vmem:[%s9] sm:$0xf]
        %v507 = vld [vmem:[%s9 + $0x4] sm:$0xf]
        %v508 = vld [vmem:[%s9 + $0x8] sm:$0xf]
        %v509 = vld [vmem:[%s9 + $0xc] sm:$0xf]
        %v510 = vpack.c.bf16 %v505, %v505
        %v511 = vpack.c.bf16 %v491, %v491
        %512 = vxpose.xlu0.c.b16.start [1/8] %v510, 128
        %513 = vxpose.xlu0.c.b16.cont [2/8] 0, 128
        %514 = vxpose.xlu0.c.b16.cont [3/8] 0, 128
        %515 = vxpose.xlu0.c.b16.cont [4/8] 0, 128
        %516 = vxpose.xlu0.c.b16.cont [5/8] 0, 128
        %517 = vxpose.xlu0.c.b16.cont [6/8] 0, 128
        %518 = vxpose.xlu0.c.b16.cont [7/8] 0, 128
        %519 = vxpose.xlu0.c.b16.end [8/8] 0, 128
        %v520 = vpop.trf.xlu0
        %v521 = vpop.trf.xlu0
        %v522 = vpop.trf.xlu0
        %v523 = vpop.trf.xlu0
        %v524 = vpop.trf.xlu0
        %v525 = vpop.trf.xlu0
        %v526 = vpop.trf.xlu0
        %v527 = vpop.trf.xlu0
        %529 = vrot.lane.b32.xlu0 %v511, 96
        %v530 = vpop.permute.xlu0 %529
        %vm531 = vcmask 64512
        %v533 = vsel %vm531, %v520, 0
        %v536 = vsel %vm531, %v521, 0
        %vm538 = vcmask 1043456
        %v540 = vsel %vm538, %v530, 0
        %542 = vmatprep.subr.bf16.mxu0 0
        %543 = vmatpush1.bf16.msra.mxu0 0
        %544 = vmatprep.subr.bf16.mxu0 0
        %545 = vmatpush1.bf16.msra.mxu0 0
        %546 = vmatprep.subr.bf16.mxu0 0
        %547 = vmatpush1.bf16.msra.mxu0 0
        %548 = vmatprep.subr.bf16.mxu0 0
        %549 = vmatpush1.bf16.msra.mxu0 0
        %550 = vmatprep.subr.bf16.mxu0 0
        %551 = vmatpush1.bf16.msra.mxu0 0
        %552 = vmatprep.subr.bf16.mxu0 0
        %553 = vmatpush1.bf16.msra.mxu0 0
        %554 = vmatprep.subr.bf16.mxu0 0
        %555 = vmatpush1.bf16.msra.mxu0 0
        %556 = vmatprep.subr.bf16.mxu0 0
        %557 = vmatpush1.bf16.msra.mxu0 %v540
        %558 = vmatprep.subr.bf16.mxu0 0
        %559 = vmatpush2.bf16.msra.mxu0 0
        %560 = vmatprep.subr.bf16.mxu0 0
        %561 = vmatpush2.bf16.msra.mxu0 0
        %562 = vmatprep.subr.bf16.mxu0 0
        %563 = vmatpush2.bf16.msra.mxu0 0
        %564 = vmatprep.subr.bf16.mxu0 0
        %565 = vmatpush2.bf16.msra.mxu0 0
        %566 = vmatprep.subr.bf16.mxu0 0
        %567 = vmatpush2.bf16.msra.mxu0 0
        %568 = vmatprep.subr.bf16.mxu0 0
        %569 = vmatpush2.bf16.msra.mxu0 0
        %570 = vmatprep.subr.bf16.mxu0 0
        %571 = vmatpush2.bf16.msra.mxu0 0
        %572 = vmatprep.subr.bf16.mxu0 0
        %573 = vmatpush2.bf16.msra.mxu0 0
        %574 = vmatprep.mubr.bf16.mxu0 0
        %575 = vmatmul.mubr.bf16.gmra.mxu0 %v533
        %v576 = vpop.f32.mrf.mxu0
        %v577 = vadd.f32 0.0, %v576
        %v578 = vpop.f32.mrf.mxu0
        %v579 = vpop.f32.mrf.mxu0
        %v580 = vadd.f32 0.0, %v579
        %v581 = vpop.f32.mrf.mxu0
        %582 = vmatprep.mubr.bf16.mxu0 0
        %583 = vmatmul.mubr.bf16.gmra.mxu0 %v536
        %v584 = vpop.f32.mrf.mxu0
        %v585 = vadd.f32 0.0, %v584
        %v586 = vpop.f32.mrf.mxu0
        %v587 = vpop.f32.mrf.mxu0
        %v588 = vadd.f32 0.0, %v587
        %v589 = vpop.f32.mrf.mxu0
        %590 = vdwg.mxu0
        %v591 = vunpack.c.l.bf16 %v506
        %v592 = vunpack.c.l.bf16 %v507
        %v593 = vunpack.c.l.bf16 %v508
        %v594 = vunpack.c.l.bf16 %v509
        %v595 = vmul.f32 %v577, %v591
        %v596 = vmul.f32 %v580, %v592
        %v597 = vmul.f32 %v585, %v593
        %v598 = vmul.f32 %v588, %v594
        %v599 = vsel %vm393, %v505, 0.0
        %v600 = vrot.slane %v599, 4
        %v601 = vadd.f32 %v599, %v600
        %v602 = vrot.slane %v601, 2
        %v603 = vadd.f32 %v601, %v602
        %v604 = vrot.slane %v603, 1
        %v605 = vadd.f32 %v603, %v604
        %v606 = vpack.c.bf16 %v500, %v500
        %v607 = vpack.c.bf16 %v596, %v595
        %v608 = vpack.c.bf16 %v598, %v597
        %v610 = vsel %vm393, %v606, 0
        %612 = vmatprep.subr.bf16.mxu0 0
        %613 = vmatpush1.bf16.msra.mxu0 0
        %614 = vmatprep.subr.bf16.mxu0 0
        %615 = vmatpush1.bf16.msra.mxu0 0
        %616 = vmatprep.subr.bf16.mxu0 0
        %617 = vmatpush1.bf16.msra.mxu0 0
        %618 = vmatprep.subr.bf16.mxu0 0
        %619 = vmatpush1.bf16.msra.mxu0 0
        %620 = vmatprep.subr.bf16.mxu0 0
        %621 = vmatpush1.bf16.msra.mxu0 0
        %622 = vmatprep.subr.bf16.mxu0 0
        %623 = vmatpush1.bf16.msra.mxu0 0
        %624 = vmatprep.subr.bf16.mxu0 0
        %625 = vmatpush1.bf16.msra.mxu0 %v608
        %626 = vmatprep.subr.bf16.mxu0 0
        %627 = vmatpush1.bf16.msra.mxu0 %v607
        %628 = vmatprep.subr.bf16.mxu0 0
        %629 = vmatpush2.bf16.msra.mxu0 0
        %630 = vmatprep.subr.bf16.mxu0 0
        %631 = vmatpush2.bf16.msra.mxu0 0
        %632 = vmatprep.subr.bf16.mxu0 0
        %633 = vmatpush2.bf16.msra.mxu0 0
        %634 = vmatprep.subr.bf16.mxu0 0
        %635 = vmatpush2.bf16.msra.mxu0 0
        %636 = vmatprep.subr.bf16.mxu0 0
        %637 = vmatpush2.bf16.msra.mxu0 0
        %638 = vmatprep.subr.bf16.mxu0 0
        %639 = vmatpush2.bf16.msra.mxu0 0
        %640 = vmatprep.subr.bf16.mxu0 0
        %641 = vmatpush2.bf16.msra.mxu0 0
        %642 = vmatprep.subr.bf16.mxu0 0
        %643 = vmatpush2.bf16.msra.mxu0 0
        %644 = vmatprep.mubr.bf16.mxu0 0
        %645 = vmatmul.mubr.bf16.gmra.mxu0 %v610
        %v646 = vpop.f32.mrf.mxu0
        %v647 = vadd.f32 0.0, %v646
        %v648 = vpop.f32.mrf.mxu0
        %v649 = vpop.f32.mrf.mxu0
        %v650 = vpop.f32.mrf.mxu0
        %651 = vdwg.mxu0
        %v652 = vmul.f32 %v500, %v605
        %v653 = vpack.c.bf16 %v652, %v652
        %v658 = vunpack.c.l.b16 %v506
        %v659 = vunpack.c.l.b16 %v507
        %v660 = vunpack.c.l.b16 %v508
        %v661 = vunpack.c.l.b16 %v509
        %v662 = vpack.c.b16 %v659, %v658
        %v663 = vpack.c.b16 %v661, %v660
        %v667 = vsel %vm393, %v653, 0
        %669 = vmatprep.subr.bf16.mxu0 0
        %670 = vmatpush1.bf16.msra.mxu0 0
        %671 = vmatprep.subr.bf16.mxu0 0
        %672 = vmatpush1.bf16.msra.mxu0 0
        %673 = vmatprep.subr.bf16.mxu0 0
        %674 = vmatpush1.bf16.msra.mxu0 0
        %675 = vmatprep.subr.bf16.mxu0 0
        %676 = vmatpush1.bf16.msra.mxu0 0
        %677 = vmatprep.subr.bf16.mxu0 0
        %678 = vmatpush1.bf16.msra.mxu0 0
        %679 = vmatprep.subr.bf16.mxu0 0
        %680 = vmatpush1.bf16.msra.mxu0 0
        %681 = vmatprep.subr.bf16.mxu0 0
        %682 = vmatpush1.bf16.msra.mxu0 %v663
        %683 = vmatprep.subr.bf16.mxu0 0
        %684 = vmatpush1.bf16.msra.mxu0 %v662
        %685 = vmatprep.subr.bf16.mxu0 0
        %686 = vmatpush2.bf16.msra.mxu0 0
        %687 = vmatprep.subr.bf16.mxu0 0
        %688 = vmatpush2.bf16.msra.mxu0 0
        %689 = vmatprep.subr.bf16.mxu0 0
        %690 = vmatpush2.bf16.msra.mxu0 0
        %691 = vmatprep.subr.bf16.mxu0 0
        %692 = vmatpush2.bf16.msra.mxu0 0
        %693 = vmatprep.subr.bf16.mxu0 0
        %694 = vmatpush2.bf16.msra.mxu0 0
        %695 = vmatprep.subr.bf16.mxu0 0
        %696 = vmatpush2.bf16.msra.mxu0 0
        %697 = vmatprep.subr.bf16.mxu0 0
        %698 = vmatpush2.bf16.msra.mxu0 0
        %699 = vmatprep.subr.bf16.mxu0 0
        %700 = vmatpush2.bf16.msra.mxu0 0
        %701 = vmatprep.mubr.bf16.mxu0 0
        %702 = vmatmul.mubr.bf16.gmra.mxu0 %v667
        %v703 = vpop.f32.mrf.mxu0
        %v704 = vadd.f32 1e-06, %v703
        %v705 = vpop.f32.mrf.mxu0
        %v706 = vpop.f32.mrf.mxu0
        %v707 = vpop.f32.mrf.mxu0
        %708 = vdwg.mxu0
        %v709 = vrcp.pop %v704
        %v710 = vmul.f32 %v647, %v709
        %v711 = vld [vmem:[%s8] sm:$0x1]
        %v712 = vld [vmem:[%s8 + $0x1] sm:$0x1]
        %v713 = vld [vmem:[%s8 + $0x2] sm:$0x1]
        %v714 = vld [vmem:[%s8 + $0x3] sm:$0x1]
        %v715 = vpack.c.bf16 %v710, %v710
        %v716 = vld [vmem:[%s4] sm:$0xf]
        %v717 = vld [vmem:[%s4 + $0x4] sm:$0xf]
        %v718 = vld [vmem:[%s4 + $0x8] sm:$0xf]
        %v719 = vld [vmem:[%s4 + $0xc] sm:$0xf]
        %v724 = vunpack.c.l.b16 %v716
        %v725 = vunpack.c.l.b16 %v717
        %v726 = vunpack.c.l.b16 %v718
        %v727 = vunpack.c.l.b16 %v719
        %v728 = vpack.c.b16 %v725, %v724
        %v729 = vpack.c.b16 %v727, %v726
        %v733 = vsel %vm393, %v715, 0
        %735 = vmatprep.subr.bf16.mxu0 0
        %736 = vmatpush1.bf16.msra.mxu0 0
        %737 = vmatprep.subr.bf16.mxu0 0
        %738 = vmatpush1.bf16.msra.mxu0 0
        %739 = vmatprep.subr.bf16.mxu0 0
        %740 = vmatpush1.bf16.msra.mxu0 0
        %741 = vmatprep.subr.bf16.mxu0 0
        %742 = vmatpush1.bf16.msra.mxu0 0
        %743 = vmatprep.subr.bf16.mxu0 0
        %744 = vmatpush1.bf16.msra.mxu0 0
        %745 = vmatprep.subr.bf16.mxu0 0
        %746 = vmatpush1.bf16.msra.mxu0 0
        %747 = vmatprep.subr.bf16.mxu0 0
        %748 = vmatpush1.bf16.msra.mxu0 %v729
        %749 = vmatprep.subr.bf16.mxu0 0
        %750 = vmatpush1.bf16.msra.mxu0 %v728
        %751 = vmatprep.subr.bf16.mxu0 0
        %752 = vmatpush2.bf16.msra.mxu0 0
        %753 = vmatprep.subr.bf16.mxu0 0
        %754 = vmatpush2.bf16.msra.mxu0 0
        %755 = vmatprep.subr.bf16.mxu0 0
        %756 = vmatpush2.bf16.msra.mxu0 0
        %757 = vmatprep.subr.bf16.mxu0 0
        %758 = vmatpush2.bf16.msra.mxu0 0
        %759 = vmatprep.subr.bf16.mxu0 0
        %760 = vmatpush2.bf16.msra.mxu0 0
        %761 = vmatprep.subr.bf16.mxu0 0
        %762 = vmatpush2.bf16.msra.mxu0 0
        %763 = vmatprep.subr.bf16.mxu0 0
        %764 = vmatpush2.bf16.msra.mxu0 0
        %765 = vmatprep.subr.bf16.mxu0 0
        %766 = vmatpush2.bf16.msra.mxu0 0
        %767 = vmatprep.mubr.bf16.mxu0 0
        %768 = vmatmul.mubr.bf16.gmra.mxu0 %v733
        %v769 = vpop.f32.mrf.mxu0
        %v770 = vadd.f32 0.0, %v769
        %v771 = vpop.f32.mrf.mxu0
        %v772 = vpop.f32.mrf.mxu0
        %v773 = vpop.f32.mrf.mxu0
        %774 = vdwg.mxu0
        %v775 = vsel %vm393, %v770, 0.0
        %776 = vadd.xlane.f32.xlu0 %v775
        %v777 = vpop.xlane.xlu0 %776
        %v778 = vrcp.pop 32.0
        %v779 = vmul.f32 %v777, %v778
        %v780 = vsub.f32 %v770, %v779
        %v781 = vmul.f32 %v780, %v780
        %v782 = vsel %vm393, %v781, 0.0
        %783 = vadd.xlane.f32.xlu0 %v782
        %v784 = vpop.xlane.xlu0 %783
        %v785 = vmul.f32 %v784, %v778
        %v786 = vadd.f32 %v785, 1e-05
        %v787 = vrsqrt.pop %v786
        %v788 = vmul.f32 %v780, %v787
        %v789 = vlaneseq
        %v790 = vshrl.u32 %v789, 7
        %v791 = vsub.s32 0, %v790
        %v792 = vrot.slane %v711, %v791
        %v793 = vmul.f32 %v788, %v792
        %v794 = vlaneseq
        %v795 = vshrl.u32 %v794, 7
        %v796 = vsub.s32 0, %v795
        %v797 = vrot.slane %v712, %v796
        %v798 = vadd.f32 %v793, %v797
        %v799 = vld [vmem:[%s5] sm:$0xf]
        %v800 = vld [vmem:[%s5 + $0x4] sm:$0xf]
        %v801 = vld [vmem:[%s5 + $0x8] sm:$0xf]
        %v802 = vld [vmem:[%s5 + $0xc] sm:$0xf]
        %v803 = vpack.c.bf16 %v798, %v798
        %v804 = vld [vmem:[%s6] sm:$0xf]
        %v805 = vld [vmem:[%s6 + $0x4] sm:$0xf]
        %v806 = vld [vmem:[%s6 + $0x8] sm:$0xf]
        %v807 = vld [vmem:[%s6 + $0xc] sm:$0xf]
        %v812 = vunpack.c.l.b16 %v804
        %v813 = vunpack.c.l.b16 %v805
        %v814 = vunpack.c.l.b16 %v806
        %v815 = vunpack.c.l.b16 %v807
        %v816 = vpack.c.b16 %v813, %v812
        %v817 = vpack.c.b16 %v815, %v814
        %v821 = vsel %vm393, %v803, 0
        %823 = vmatprep.subr.bf16.mxu0 0
        %824 = vmatpush1.bf16.msra.mxu0 0
        %825 = vmatprep.subr.bf16.mxu0 0
        %826 = vmatpush1.bf16.msra.mxu0 0
        %827 = vmatprep.subr.bf16.mxu0 0
        %828 = vmatpush1.bf16.msra.mxu0 0
        %829 = vmatprep.subr.bf16.mxu0 0
        %830 = vmatpush1.bf16.msra.mxu0 0
        %831 = vmatprep.subr.bf16.mxu0 0
        %832 = vmatpush1.bf16.msra.mxu0 0
        %833 = vmatprep.subr.bf16.mxu0 0
        %834 = vmatpush1.bf16.msra.mxu0 0
        %835 = vmatprep.subr.bf16.mxu0 0
        %836 = vmatpush1.bf16.msra.mxu0 %v817
        %837 = vmatprep.subr.bf16.mxu0 0
        %838 = vmatpush1.bf16.msra.mxu0 %v816
        %839 = vmatprep.subr.bf16.mxu0 0
        %840 = vmatpush2.bf16.msra.mxu0 0
        %841 = vmatprep.subr.bf16.mxu0 0
        %842 = vmatpush2.bf16.msra.mxu0 0
        %843 = vmatprep.subr.bf16.mxu0 0
        %844 = vmatpush2.bf16.msra.mxu0 0
        %845 = vmatprep.subr.bf16.mxu0 0
        %846 = vmatpush2.bf16.msra.mxu0 0
        %847 = vmatprep.subr.bf16.mxu0 0
        %848 = vmatpush2.bf16.msra.mxu0 0
        %849 = vmatprep.subr.bf16.mxu0 0
        %850 = vmatpush2.bf16.msra.mxu0 0
        %851 = vmatprep.subr.bf16.mxu0 0
        %852 = vmatpush2.bf16.msra.mxu0 0
        %853 = vmatprep.subr.bf16.mxu0 0
        %854 = vmatpush2.bf16.msra.mxu0 0
        %855 = vmatprep.mubr.bf16.mxu0 0
        %856 = vmatmul.mubr.bf16.gmra.mxu0 %v821
        %v857 = vpop.f32.mrf.mxu0
        %v858 = vadd.f32 0.0, %v857
        %v859 = vpop.f32.mrf.mxu0
        %v860 = vpop.f32.mrf.mxu0
        %v861 = vpop.f32.mrf.mxu0
        %862 = vdwg.mxu0
        %v867 = vunpack.c.l.b16 %v799
        %v868 = vunpack.c.l.b16 %v800
        %v869 = vunpack.c.l.b16 %v801
        %v870 = vunpack.c.l.b16 %v802
        %v871 = vpack.c.b16 %v868, %v867
        %v872 = vpack.c.b16 %v870, %v869
        %875 = vmatprep.subr.bf16.mxu0 0
        %876 = vmatpush1.bf16.msra.mxu0 0
        %877 = vmatprep.subr.bf16.mxu0 0
        %878 = vmatpush1.bf16.msra.mxu0 0
        %879 = vmatprep.subr.bf16.mxu0 0
        %880 = vmatpush1.bf16.msra.mxu0 0
        %881 = vmatprep.subr.bf16.mxu0 0
        %882 = vmatpush1.bf16.msra.mxu0 0
        %883 = vmatprep.subr.bf16.mxu0 0
        %884 = vmatpush1.bf16.msra.mxu0 0
        %885 = vmatprep.subr.bf16.mxu0 0
        %886 = vmatpush1.bf16.msra.mxu0 0
        %887 = vmatprep.subr.bf16.mxu0 0
        %888 = vmatpush1.bf16.msra.mxu0 %v872
        %889 = vmatprep.subr.bf16.mxu0 0
        %890 = vmatpush1.bf16.msra.mxu0 %v871
        %891 = vmatprep.subr.bf16.mxu0 0
        %892 = vmatpush2.bf16.msra.mxu0 0
        %893 = vmatprep.subr.bf16.mxu0 0
        %894 = vmatpush2.bf16.msra.mxu0 0
        %895 = vmatprep.subr.bf16.mxu0 0
        %896 = vmatpush2.bf16.msra.mxu0 0
        %897 = vmatprep.subr.bf16.mxu0 0
        %898 = vmatpush2.bf16.msra.mxu0 0
        %899 = vmatprep.subr.bf16.mxu0 0
        %900 = vmatpush2.bf16.msra.mxu0 0
        %901 = vmatprep.subr.bf16.mxu0 0
        %902 = vmatpush2.bf16.msra.mxu0 0
        %903 = vmatprep.subr.bf16.mxu0 0
        %904 = vmatpush2.bf16.msra.mxu0 0
        %905 = vmatprep.subr.bf16.mxu0 0
        %906 = vmatpush2.bf16.msra.mxu0 0
        %907 = vmatprep.mubr.bf16.mxu0 0
        %908 = vmatmul.mubr.bf16.gmra.mxu0 %v395
        %v909 = vpop.f32.mrf.mxu0
        %v910 = vadd.f32 %v858, %v909
        %v911 = vpop.f32.mrf.mxu0
        %v912 = vpop.f32.mrf.mxu0
        %v913 = vpop.f32.mrf.mxu0
        %914 = vdwg.mxu0
        %v915 = vmax.f32 %v910, 0.0
        %v916 = vpack.c.bf16 %v915, %v915
        %v917 = vld [vmem:[%s7] sm:$0xf]
        %v918 = vld [vmem:[%s7 + $0x4] sm:$0xf]
        %v919 = vld [vmem:[%s7 + $0x8] sm:$0xf]
        %v920 = vld [vmem:[%s7 + $0xc] sm:$0xf]
        %v921 = vld [vmem:[%s7 + $0x10] sm:$0xf]
        %v922 = vld [vmem:[%s7 + $0x14] sm:$0xf]
        %v923 = vld [vmem:[%s7 + $0x18] sm:$0xf]
        %v924 = vld [vmem:[%s7 + $0x1c] sm:$0xf]
        %v933 = vunpack.c.l.b16 %v917
        %v934 = vunpack.c.l.b16 %v918
        %v935 = vunpack.c.l.b16 %v919
        %v936 = vunpack.c.l.b16 %v920
        %v937 = vunpack.c.l.b16 %v921
        %v938 = vunpack.c.l.b16 %v922
        %v939 = vunpack.c.l.b16 %v923
        %v940 = vunpack.c.l.b16 %v924
        %v941 = vpack.c.b16 %v934, %v933
        %v942 = vpack.c.b16 %v936, %v935
        %v943 = vpack.c.b16 %v938, %v937
        %v944 = vpack.c.b16 %v940, %v939
        %vm949 = vcmask 523264
        %v951 = vsel %vm949, %v916, 0
        %953 = vmatprep.subr.bf16.mxu0 0
        %954 = vmatpush1.bf16.msra.mxu0 0
        %955 = vmatprep.subr.bf16.mxu0 0
        %956 = vmatpush1.bf16.msra.mxu0 0
        %957 = vmatprep.subr.bf16.mxu0 0
        %958 = vmatpush1.bf16.msra.mxu0 0
        %959 = vmatprep.subr.bf16.mxu0 0
        %960 = vmatpush1.bf16.msra.mxu0 0
        %961 = vmatprep.subr.bf16.mxu0 0
        %962 = vmatpush1.bf16.msra.mxu0 %v944
        %963 = vmatprep.subr.bf16.mxu0 0
        %964 = vmatpush1.bf16.msra.mxu0 %v943
        %965 = vmatprep.subr.bf16.mxu0 0
        %966 = vmatpush1.bf16.msra.mxu0 %v942
        %967 = vmatprep.subr.bf16.mxu0 0
        %968 = vmatpush1.bf16.msra.mxu0 %v941
        %969 = vmatprep.subr.bf16.mxu0 0
        %970 = vmatpush2.bf16.msra.mxu0 0
        %971 = vmatprep.subr.bf16.mxu0 0
        %972 = vmatpush2.bf16.msra.mxu0 0
        %973 = vmatprep.subr.bf16.mxu0 0
        %974 = vmatpush2.bf16.msra.mxu0 0
        %975 = vmatprep.subr.bf16.mxu0 0
        %976 = vmatpush2.bf16.msra.mxu0 0
        %977 = vmatprep.subr.bf16.mxu0 0
        %978 = vmatpush2.bf16.msra.mxu0 0
        %979 = vmatprep.subr.bf16.mxu0 0
        %980 = vmatpush2.bf16.msra.mxu0 0
        %981 = vmatprep.subr.bf16.mxu0 0
        %982 = vmatpush2.bf16.msra.mxu0 0
        %983 = vmatprep.subr.bf16.mxu0 0
        %984 = vmatpush2.bf16.msra.mxu0 0
        %985 = vmatprep.mubr.bf16.mxu0 0
        %986 = vmatmul.mubr.bf16.gmra.mxu0 %v951
        %v987 = vpop.f32.mrf.mxu0
        %v988 = vadd.f32 0.0, %v987
        %v989 = vpop.f32.mrf.mxu0
        %v990 = vpop.f32.mrf.mxu0
        %v991 = vpop.f32.mrf.mxu0
        %992 = vdwg.mxu0
        %v993 = vsel %vm393, %v988, 0.0
        %994 = vadd.xlane.f32.xlu0 %v993
        %v995 = vpop.xlane.xlu0 %994
        %v996 = vmul.f32 %v995, %v778
        %v997 = vsub.f32 %v988, %v996
        %v998 = vmul.f32 %v997, %v997
        %v999 = vsel %vm393, %v998, 0.0
        %1000 = vadd.xlane.f32.xlu0 %v999
        %v1001 = vpop.xlane.xlu0 %1000
        %v1002 = vmul.f32 %v1001, %v778
        %v1003 = vadd.f32 %v1002, 1e-05
        %v1004 = vrsqrt.pop %v1003
        %v1005 = vmul.f32 %v997, %v1004
        %v1006 = vlaneseq
        %v1007 = vshrl.u32 %v1006, 7
        %v1008 = vsub.s32 0, %v1007
        %v1009 = vrot.slane %v713, %v1008
        %v1010 = vmul.f32 %v1005, %v1009
        %v1011 = vlaneseq
        %v1012 = vshrl.u32 %v1011, 7
        %v1013 = vsub.s32 0, %v1012
        %v1014 = vrot.slane %v714, %v1013
        %v1015 = vadd.f32 %v1010, %v1014
        %v1016 = vadd.f32 %v373, %v1015
        %1017 = vst.msk [vmem:[%s363] sm:$0xff] %vm393, %v1016
        %s1018 = sand.u32 %s252, 1
        %s1019 = scalar_lea.sflag [#allocation3], %s1018
        %s1020 = sand.u32 %s252, 1
        %s1021 = smul.addr %s1020, 8
        %s1022 = scalar_lea.vmem [#allocation2], %s1021
        // Predicated region
        $region61: #{feature_transformer.7} parent=59 // pred_check
          %p1023 = pneg %p262
        $region62: #{feature_transformer.7} parent=59 // pred_check_branch
          %1025 = sbr.rel (%p1023) target = $region64
        $region63: #{feature_transformer.7} parent=59 // pred_region
          %s1027 = ssub.s32 128, 128
          %1028 = vsyncadd %s1019, %s1027
          %s1029 = smul.addr %s24, 128
          %s1030 = scalar_lea.hbm %s10, %s1029
          %s1032 = sshll.u32 %s1022, 4
          %s1033 = int_to_ptr.vmem [resolvable:$true] %s1032
          %1035 = dma.vmem_to_hbm [thread:$0]  %s1033, 128, %s1030, %s1019
        $region64: #{feature_transformer.7} parent=59 // pred_fallthru
          _
      $region60: #{feature_transformer.7} parent=5 // pred_fallthru
        _
      %p1036 = scmp.le.s32.totalorder 2, %s19
      // Predicated region
      $region65: #{feature_transformer.7} parent=5 // pred_check
        %p1037 = pneg %p1036
      $region66: #{feature_transformer.7} parent=5 // pred_check_branch
        %1039 = sbr.rel (%p1037) target = $region68
      $region67: #{feature_transformer.7} parent=5 // pred_region
        %s1040 = ssub.s32 %s19, 2
        // Predicated region
        $region69: #{feature_transformer.7} parent=67 // pred_check
          %p1041 = pneg %p268
        $region70: #{feature_transformer.7} parent=67 // pred_check_branch
          %1043 = sbr.rel (%p1041) target = $region72
        $region71: #{feature_transformer.7} parent=67 // pred_region
          %s1044 = sand.u32 %s253, 1
          %s1045 = scalar_lea.sflag [#allocation3], %s1044
          %s1046 = sand.u32 %s253, 1
          %s1047 = smul.addr %s1046, 8
          %s1048 = scalar_lea.vmem [#allocation2], %s1047
          %1049 = dma.done %s1045, 128
        $region72: #{feature_transformer.7} parent=67 // pred_fallthru
          _
      $region68: #{feature_transformer.7} parent=5 // pred_fallthru
        _
    $region6: #{feature_transformer.7} parent=1 // loop_footer
      %s23 = sadd.s32 1, %s19
    $region7: #{feature_transformer.7} parent=1 // loop_footer_branch
      %18 = sbr.rel target = $region3
    $region8: #{feature_transformer.7} parent=1 // loop_exit
      _
    %1050 = vsyncpa [#allocation3], 1
    %s1051 = scalar_lea.sflag [#allocation3], 1
    %1052 = vsyncpa %s1051, 1

</llo_original>
